<compile_context>
chip_gen: v6e
topology: v6e:2x2x1
jax: 0.10.0
libtpu: 0.0.40
codegen_flags: <defaults>
</compile_context>

<pallas_src>
from functools import partial

import jax
import jax.numpy as jnp
from jax.experimental import pallas as pl
from jax.experimental.pallas import tpu as pltpu

# ---- model dims (match the PyTorch module) -------------------------------
DIM_IN = 28 * 28      # encoder/decoder hard-code 28x28 views
DIM1 = 64
DIM2 = 32
DIM_Z = 10
VOCAB = 64            # vocab_size in vqvae.py

OUT_W = 896           # 7*128: lane-dense packed output width  [xp | z_e | z_q | 0-pad]


def _round_up(n, m):
    return ((n + m - 1) // m) * m


def _vqvae_kernel(
    x_ref,                                                   # (TM, 784) f32
    ew1_ref, eb1_ref, ew2_ref, eb2_ref, ewz_ref, ebz_ref,    # encoder params
    cb_ref, cbT_ref, cbsq_ref,                               # codebook (K,D), (D,K), (1,K) f32
    dw1_ref, db1_ref, dw2_ref, db2_ref, dw3_ref, db3_ref,    # decoder params
    out_ref,                                                 # (TM, 896) bf16 packed output
    *, act_dtype,
):
    f32 = jnp.float32
    bf16 = jnp.bfloat16

    x = x_ref[...].astype(bf16)                              # cast hidden under DMA

    # ---------------- encoder: fc1 -> relu -> fc2 -> relu -> fcz ----------
    # bf16 MXU operands everywhere, f32 accumulation.
    h = jnp.dot(x, ew1_ref[...], preferred_element_type=f32) + eb1_ref[...]
    h = jnp.maximum(h, 0.0)
    h = jnp.dot(h.astype(bf16), ew2_ref[...], preferred_element_type=f32) + eb2_ref[...]
    h = jnp.maximum(h, 0.0)
    z = jnp.dot(h.astype(bf16), ewz_ref[...], preferred_element_type=f32) + ebz_ref[...]

    # ---------------- vector quantization (nearest codebook entry) --------
    # argmin_k ||z - e_k||^2  ==  argmin_k (||e_k||^2 - 2 z.e_k)   (||z||^2 const per row)
    # TODO(synk): default TPU matmul precision bf16-rounds z/e for this dot; near-tie
    # argmin indices may differ from the f32 torch.argmin reference.
    E = cb_ref[...]                                                           # (K, D) f32
    d = cbsq_ref[...] - 2.0 * jnp.dot(z, cbT_ref[...], preferred_element_type=f32)  # (TM, K)
    K = E.shape[0]
    lane_ids = jax.lax.broadcasted_iota(jnp.int32, d.shape, 1)                # (TM, K)
    dmin = jnp.min(d, axis=-1, keepdims=True)                                 # (TM, 1)
    # first index achieving the minimum (matches torch.argmin tie-break)
    idx = jnp.min(jnp.where(d == dmin, lane_ids, K), axis=-1, keepdims=True)  # (TM, 1)
    onehot = (lane_ids == idx).astype(f32)                                    # (TM, K)
    zq = jnp.dot(onehot, E, preferred_element_type=f32)                       # (TM, D)

    # ---------------- decoder: fc1 -> relu -> fc2 -> relu -> fc3 -> sigmoid
    g = jnp.dot(zq.astype(bf16), dw1_ref[...], preferred_element_type=f32) + db1_ref[...]
    g = jnp.maximum(g, 0.0)
    g = jnp.dot(g.astype(bf16), dw2_ref[...], preferred_element_type=f32) + db2_ref[...]
    g = jnp.maximum(g, 0.0)
    logits = jnp.dot(g.astype(bf16), dw3_ref[...], preferred_element_type=f32) + db3_ref[...]

    # Sigmoid epilogue: bf16 on v6e/v7x (bf16 EUP), f32 on v5e/other.
    l = logits.astype(act_dtype)
    xp = (1.0 / (1.0 + jnp.exp(-l))).astype(out_ref.dtype)                    # (TM, 784)

    # Pack [xp | z_e | z_q | zeros] into one lane-dense 896-wide bf16 block.
    rows = xp.shape[0]
    zpad = jnp.zeros((rows, OUT_W - DIM_IN - 2 * DIM_Z), out_ref.dtype)
    out_ref[...] = jnp.concatenate(
        [xp, z.astype(out_ref.dtype), zq.astype(out_ref.dtype), zpad], axis=-1)


def init_params(key):
    """Deterministic init mimicking PyTorch defaults (uniform +/- 1/sqrt(fan_in));
    codebook uniform(-1/K, 1/K). Weights stored as (in, out), f32."""
    def linear(k, fan_in, fan_out):
        kw, kb = jax.random.split(k)
        bound = 1.0 / jnp.sqrt(fan_in)
        w = jax.random.uniform(kw, (fan_in, fan_out), jnp.float32, -bound, bound)
        b = jax.random.uniform(kb, (1, fan_out), jnp.float32, -bound, bound)
        return w, b

    keys = jax.random.split(key, 8)
    ew1, eb1 = linear(keys[0], DIM_IN, DIM1)
    ew2, eb2 = linear(keys[1], DIM1, DIM2)
    ewz, ebz = linear(keys[2], DIM2, DIM_Z)
    dw1, db1 = linear(keys[3], DIM_Z, DIM2)
    dw2, db2 = linear(keys[4], DIM_Z if False else DIM_Z, DIM2)  # placeholder, replaced below
    dw1, db1 = linear(keys[3], DIM_Z, DIM2)
    dw2, db2 = linear(keys[4], DIM2, DIM1)
    dw3, db3 = linear(keys[5], DIM1, DIM_IN)
    cb = jax.random.uniform(keys[6], (VOCAB, DIM_Z), jnp.float32,
                            -1.0 / VOCAB, 1.0 / VOCAB)
    return dict(ew1=ew1, eb1=eb1, ew2=ew2, eb2=eb2, ewz=ewz, ebz=ebz,
                dw1=dw1, db1=db1, dw2=dw2, db2=db2, dw3=dw3, db3=db3, cb=cb)


def _tpu_config():
    """Generation-specific tiling / VMEM budget / epilogue dtype."""
    try:
        kind = jax.devices()[0].device_kind.lower().replace(" ", "")
    except Exception:
        kind = ""
    is_v7 = ("v7" in kind) or ("tpu7" in kind)
    is_128mib = (("v5" in kind) or ("v6" in kind)) and not is_v7
    block_rows = 2048 if is_128mib else 1024              # v7x/unknown: 64 MiB VMEM -> smaller tile
    vmem_limit = (80 if is_128mib else 48) * 1024 * 1024
    # bf16 EUP exists on v6e/v7x; keep f32 transcendental math on v5e / unknown chips.
    act_dtype = jnp.bfloat16 if (is_v7 or ("v6" in kind)) else jnp.float32
    return is_v7, block_rows, vmem_limit, act_dtype


@jax.jit
def vqvae_forward(x, params):
    """x: (B, 1, 28, 28) float32.
    Returns (xp, z_e, z_d_with_grad) shaped like the PyTorch module:
    (B,1,28,28) [bf16], (B,Dz,1,1) [f32], (B,Dz,1,1) [f32]."""
    B = x.shape[0]
    x_flat = x.reshape(B, DIM_IN).astype(jnp.float32)

    is_v7, block_rows, vmem_limit, act_dtype = _tpu_config()

    # Batch tile: multiple of 16 (f32 + bf16 sublane tiling), capped by block_rows.
    if is_v7:
        # Aim for an even split so the "parallel" axis feeds both TensorCores.
        TM = min(block_rows, _round_up(pl.cdiv(B, 2), 16))
    else:
        TM = min(block_rows, _round_up(B, 16))
    B_pad = _round_up(B, TM)
    if is_v7 and (B_pad // TM) < 2:
        B_pad = 2 * TM                                   # guarantee >= 2 grid steps on v7x
    if B_pad != B:
        x_flat = jnp.pad(x_flat, ((0, B_pad - B), (0, 0)))

    # One-time glue hoisted out of the kernel / grid loop.
    cb = params["cb"]
    cbT = cb.T                                           # (D, K)
    cbsq = jnp.sum(cb * cb, axis=-1)[None, :]            # (1, K)

    # bf16 weights for all matmuls (f32 accumulation in-kernel); biases stay f32.
    bf16 = jnp.bfloat16
    ew1 = params["ew1"].astype(bf16)
    ew2 = params["ew2"].astype(bf16)
    ewz = params["ewz"].astype(bf16)
    dw1 = params["dw1"].astype(bf16)
    dw2 = params["dw2"].astype(bf16)
    dw3 = params["dw3"].astype(bf16)

    inputs = (
        x_flat,
        ew1, params["eb1"], ew2, params["eb2"], ewz, params["ebz"],
        cb, cbT, cbsq,
        dw1, params["db1"], dw2, params["db2"], dw3, params["db3"],
    )

    def _resident(a):
        # full-array block, same block every grid step -> stays VMEM-resident
        return pl.BlockSpec(a.shape, lambda i: (0,) * a.ndim)

    in_specs = [pl.BlockSpec((TM, DIM_IN), lambda i: (i, 0))]
    in_specs += [_resident(a) for a in inputs[1:]]

    flops_per_row = 2 * (DIM_IN * DIM1 + DIM1 * DIM2 + DIM2 * DIM_Z      # encoder
                         + DIM_Z * VOCAB + VOCAB * DIM_Z                 # VQ distance + select
                         + DIM_Z * DIM2 + DIM2 * DIM1 + DIM1 * DIM_IN)   # decoder
    cost = pl.CostEstimate(
        flops=int(B_pad) * flops_per_row,
        transcendentals=int(B_pad) * DIM_IN,
        bytes_accessed=int(B_pad) * (DIM_IN * 4 + OUT_W * 2),
    )

    grid = (B_pad // TM,)
    out = pl.pallas_call(
        partial(_vqvae_kernel, act_dtype=act_dtype),
        grid=grid,
        out_shape=jax.ShapeDtypeStruct((B_pad, OUT_W), jnp.bfloat16),
        in_specs=in_specs,
        out_specs=pl.BlockSpec((TM, OUT_W), lambda i: (i, 0)),
        compiler_params=pltpu.CompilerParams(
            dimension_semantics=("parallel",),           # megacore-shard batch tiles (v7x)
            vmem_limit_bytes=vmem_limit,
        ),
        cost_estimate=cost,
    )(*inputs)

    xp = out[:B, :DIM_IN].reshape(B, 1, 28, 28)                         # bf16 reconstruction
    z_e = out[:B, DIM_IN:DIM_IN + DIM_Z].astype(jnp.float32).reshape(B, DIM_Z, 1, 1)
    z_d_with_grad = out[:B, DIM_IN + DIM_Z:DIM_IN + 2 * DIM_Z].astype(jnp.float32)
    z_d_with_grad = z_d_with_grad.reshape(B, DIM_Z, 1, 1)
    # TODO(synk): straight-through gradient routing (detach/stop_gradient wiring)
    # is a backward-pass concern; forward values of z_d_no_grad/z_d_with_grad coincide.
    return xp, z_e, z_d_with_grad


def _reference_forward(x, params):
    """Pure-JAX f32 reference of the PyTorch forward."""
    B = x.shape[0]
    xf = x.reshape(B, DIM_IN)
    h = jax.nn.relu(xf @ params["ew1"] + params["eb1"])
    h = jax.nn.relu(h @ params["ew2"] + params["eb2"])
    z = h @ params["ewz"] + params["ebz"]
    cb = params["cb"]
    d = jnp.sum((z[:, None, :] - cb[None, :, :]) ** 2, axis=-1)
    zq = cb[jnp.argmin(d, axis=-1)]
    g = jax.nn.relu(zq @ params["dw1"] + params["db1"])
    g = jax.nn.relu(g @ params["dw2"] + params["db2"])
    xp = jax.nn.sigmoid(g @ params["dw3"] + params["db3"])
    return (xp.reshape(B, 1, 28, 28), z.reshape(B, DIM_Z, 1, 1),
            zq.reshape(B, DIM_Z, 1, 1))


if __name__ == "__main__":
    key = jax.random.PRNGKey(0)
    k_param, k_x = jax.random.split(key)
    params = init_params(k_param)

    B = 2
    x = jax.random.uniform(k_x, (B, 1, 28, 28), jnp.float32)   # NCHW like PyTorch

    xp, z_e, z_d = vqvae_forward(x, params)
    jax.block_until_ready((xp, z_e, z_d))

    assert xp.shape == (B, 1, 28, 28)
    assert z_e.shape == (B, DIM_Z, 1, 1)
    assert z_d.shape == (B, DIM_Z, 1, 1)

    xp32 = xp.astype(jnp.float32)
    assert bool(jnp.all(jnp.isfinite(xp32)))
    assert bool(jnp.all((xp32 >= 0.0) & (xp32 <= 1.0)))        # sigmoid range
    assert bool(jnp.all(jnp.isfinite(z_e))) and bool(jnp.all(jnp.isfinite(z_d)))

    # Loose sanity check against the pure-JAX f32 reference (bf16 I/O + bf16 MXU
    # operands + possible near-tie argmin flips allow small divergence).
    xp_r, ze_r, zq_r = _reference_forward(x, params)
    assert float(jnp.max(jnp.abs(xp32 - xp_r))) < 5e-2
    assert float(jnp.max(jnp.abs(z_e - ze_r))) < 1e-1
    assert float(jnp.max(jnp.abs(z_d - zq_r))) < 1e-1

    print("KERNEL_OK")
</pallas_src>

<mosaic_0001>
module attributes {stable_mosaic.version = 11 : i64} {
  func.func @_vqvae_kernel(%arg0: i32, %arg1: memref<16x784xf32, #tpu.memory_space<vmem>>, %arg2: memref<784x64xbf16, #tpu.memory_space<vmem>>, %arg3: memref<1x64xf32, #tpu.memory_space<vmem>>, %arg4: memref<64x32xbf16, #tpu.memory_space<vmem>>, %arg5: memref<1x32xf32, #tpu.memory_space<vmem>>, %arg6: memref<32x10xbf16, #tpu.memory_space<vmem>>, %arg7: memref<1x10xf32, #tpu.memory_space<vmem>>, %arg8: memref<64x10xf32, #tpu.memory_space<vmem>>, %arg9: memref<10x64xf32, #tpu.memory_space<vmem>>, %arg10: memref<1x64xf32, #tpu.memory_space<vmem>>, %arg11: memref<10x32xbf16, #tpu.memory_space<vmem>>, %arg12: memref<1x32xf32, #tpu.memory_space<vmem>>, %arg13: memref<32x64xbf16, #tpu.memory_space<vmem>>, %arg14: memref<1x64xf32, #tpu.memory_space<vmem>>, %arg15: memref<64x784xbf16, #tpu.memory_space<vmem>>, %arg16: memref<1x784xf32, #tpu.memory_space<vmem>>, %arg17: memref<16x896xbf16, #tpu.memory_space<vmem>>) attributes {dimension_semantics = [#tpu.dimension_semantics<parallel>], iteration_bounds = array<i64: 1>, scalar_prefetch = 0 : i64, scratch_operands = 0 : i64, tpu.core_type = #tpu.core_type<tc>, window_params = [{transform_indices = @transform_0, window_bounds = array<i64: 16, 784>}, {pipeline_mode = #tpu.pipeline_mode<synchronous>, transform_indices = @transform_1, window_bounds = array<i64: 784, 64>}, {pipeline_mode = #tpu.pipeline_mode<synchronous>, transform_indices = @transform_2, window_bounds = array<i64: 1, 64>}, {pipeline_mode = #tpu.pipeline_mode<synchronous>, transform_indices = @transform_3, window_bounds = array<i64: 64, 32>}, {pipeline_mode = #tpu.pipeline_mode<synchronous>, transform_indices = @transform_4, window_bounds = array<i64: 1, 32>}, {pipeline_mode = #tpu.pipeline_mode<synchronous>, transform_indices = @transform_5, window_bounds = array<i64: 32, 10>}, {pipeline_mode = #tpu.pipeline_mode<synchronous>, transform_indices = @transform_6, window_bounds = array<i64: 1, 10>}, {pipeline_mode = #tpu.pipeline_mode<synchronous>, transform_indices = @transform_7, window_bounds = array<i64: 64, 10>}, {pipeline_mode = #tpu.pipeline_mode<synchronous>, transform_indices = @transform_8, window_bounds = array<i64: 10, 64>}, {pipeline_mode = #tpu.pipeline_mode<synchronous>, transform_indices = @transform_9, window_bounds = array<i64: 1, 64>}, {pipeline_mode = #tpu.pipeline_mode<synchronous>, transform_indices = @transform_10, window_bounds = array<i64: 10, 32>}, {pipeline_mode = #tpu.pipeline_mode<synchronous>, transform_indices = @transform_11, window_bounds = array<i64: 1, 32>}, {pipeline_mode = #tpu.pipeline_mode<synchronous>, transform_indices = @transform_12, window_bounds = array<i64: 32, 64>}, {pipeline_mode = #tpu.pipeline_mode<synchronous>, transform_indices = @transform_13, window_bounds = array<i64: 1, 64>}, {pipeline_mode = #tpu.pipeline_mode<synchronous>, transform_indices = @transform_14, window_bounds = array<i64: 64, 784>}, {pipeline_mode = #tpu.pipeline_mode<synchronous>, transform_indices = @transform_15, window_bounds = array<i64: 1, 784>}, {transform_indices = @transform_16, window_bounds = array<i64: 16, 896>}]} {
    %c0 = arith.constant 0 : index
    %c0_0 = arith.constant 0 : index
    %0 = vector.load %arg1[%c0, %c0_0] : memref<16x784xf32, #tpu.memory_space<vmem>>, vector<16x784xf32>
    %1 = arith.truncf %0 : vector<16x784xf32> to vector<16x784xbf16>
    %c0_1 = arith.constant 0 : index
    %c0_2 = arith.constant 0 : index
    %2 = vector.load %arg2[%c0_1, %c0_2] : memref<784x64xbf16, #tpu.memory_space<vmem>>, vector<784x64xbf16>
    %cst = arith.constant dense<0.000000e+00> : vector<16x64xf32>
    %3 = tpu.matmul %1, %2, %cst {dimension_numbers = #tpu.dot_dimension_numbers<[1], [0], [0], [1], [0, 0, 1, 1], [], []>} : vector<16x784xbf16>, vector<784x64xbf16>, vector<16x64xf32> -> vector<16x64xf32>
    %c0_3 = arith.constant 0 : index
    %c0_4 = arith.constant 0 : index
    %4 = vector.load %arg3[%c0_3, %c0_4] : memref<1x64xf32, #tpu.memory_space<vmem>>, vector<1x64xf32>
    %5 = vector.broadcast %4 : vector<1x64xf32> to vector<16x64xf32>
    %6 = arith.addf %3, %5 : vector<16x64xf32>
    %cst_5 = arith.constant 0.000000e+00 : f32
    %7 = vector.broadcast %cst_5 : f32 to vector<16x64xf32>
    %8 = arith.maximumf %6, %7 : vector<16x64xf32>
    %9 = arith.truncf %8 : vector<16x64xf32> to vector<16x64xbf16>
    %c0_6 = arith.constant 0 : index
    %c0_7 = arith.constant 0 : index
    %10 = vector.load %arg4[%c0_6, %c0_7] : memref<64x32xbf16, #tpu.memory_space<vmem>>, vector<64x32xbf16>
    %cst_8 = arith.constant dense<0.000000e+00> : vector<16x32xf32>
    %11 = tpu.matmul %9, %10, %cst_8 {dimension_numbers = #tpu.dot_dimension_numbers<[1], [0], [0], [1], [0, 0, 1, 1], [], []>} : vector<16x64xbf16>, vector<64x32xbf16>, vector<16x32xf32> -> vector<16x32xf32>
    %c0_9 = arith.constant 0 : index
    %c0_10 = arith.constant 0 : index
    %12 = vector.load %arg5[%c0_9, %c0_10] : memref<1x32xf32, #tpu.memory_space<vmem>>, vector<1x32xf32>
    %13 = vector.broadcast %12 : vector<1x32xf32> to vector<16x32xf32>
    %14 = arith.addf %11, %13 : vector<16x32xf32>
    %cst_11 = arith.constant 0.000000e+00 : f32
    %15 = vector.broadcast %cst_11 : f32 to vector<16x32xf32>
    %16 = arith.maximumf %14, %15 : vector<16x32xf32>
    %17 = arith.truncf %16 : vector<16x32xf32> to vector<16x32xbf16>
    %c0_12 = arith.constant 0 : index
    %c0_13 = arith.constant 0 : index
    %18 = vector.load %arg6[%c0_12, %c0_13] : memref<32x10xbf16, #tpu.memory_space<vmem>>, vector<32x10xbf16>
    %cst_14 = arith.constant dense<0.000000e+00> : vector<16x10xf32>
    %19 = tpu.matmul %17, %18, %cst_14 {dimension_numbers = #tpu.dot_dimension_numbers<[1], [0], [0], [1], [0, 0, 1, 1], [], []>} : vector<16x32xbf16>, vector<32x10xbf16>, vector<16x10xf32> -> vector<16x10xf32>
    %c0_15 = arith.constant 0 : index
    %c0_16 = arith.constant 0 : index
    %20 = vector.load %arg7[%c0_15, %c0_16] : memref<1x10xf32, #tpu.memory_space<vmem>>, vector<1x10xf32>
    %21 = vector.broadcast %20 : vector<1x10xf32> to vector<16x10xf32>
    %22 = arith.addf %19, %21 : vector<16x10xf32>
    %c0_17 = arith.constant 0 : index
    %c0_18 = arith.constant 0 : index
    %23 = vector.load %arg8[%c0_17, %c0_18] : memref<64x10xf32, #tpu.memory_space<vmem>>, vector<64x10xf32>
    %c0_19 = arith.constant 0 : index
    %c0_20 = arith.constant 0 : index
    %24 = vector.load %arg10[%c0_19, %c0_20] : memref<1x64xf32, #tpu.memory_space<vmem>>, vector<1x64xf32>
    %c0_21 = arith.constant 0 : index
    %c0_22 = arith.constant 0 : index
    %25 = vector.load %arg9[%c0_21, %c0_22] : memref<10x64xf32, #tpu.memory_space<vmem>>, vector<10x64xf32>
    %cst_23 = arith.constant dense<0.000000e+00> : vector<16x64xf32>
    %26 = tpu.matmul %22, %25, %cst_23 {dimension_numbers = #tpu.dot_dimension_numbers<[1], [0], [0], [1], [0, 0, 1, 1], [], []>} : vector<16x10xf32>, vector<10x64xf32>, vector<16x64xf32> -> vector<16x64xf32>
    %cst_24 = arith.constant 2.000000e+00 : f32
    %27 = vector.broadcast %cst_24 : f32 to vector<16x64xf32>
    %28 = arith.mulf %27, %26 : vector<16x64xf32>
    %29 = vector.broadcast %24 : vector<1x64xf32> to vector<16x64xf32>
    %30 = arith.subf %29, %28 : vector<16x64xf32>
    %31 = tpu.iota {dimensions = array<i32: 1>} : vector<16x64xi32>
    %cst_25 = arith.constant dense<0x7F800000> : vector<16xf32>
    %32 = vector.multi_reduction <minimumf>, %30, %cst_25 [1] : vector<16x64xf32> to vector<16xf32>
    %33 = vector.shape_cast %32 : vector<16xf32> to vector<16x1xf32>
    %34 = vector.broadcast %33 : vector<16x1xf32> to vector<16x64xf32>
    %35 = arith.cmpf oeq, %30, %34 : vector<16x64xf32>
    %c64_i32 = arith.constant 64 : i32
    %36 = vector.broadcast %c64_i32 : i32 to vector<16x64xi32>
    %37 = arith.select %35, %31, %36 : vector<16x64xi1>, vector<16x64xi32>
    %cst_26 = arith.constant dense<2147483647> : vector<16xi32>
    %38 = vector.multi_reduction <minsi>, %37, %cst_26 [1] : vector<16x64xi32> to vector<16xi32>
    %39 = vector.shape_cast %38 : vector<16xi32> to vector<16x1xi32>
    %40 = vector.broadcast %39 : vector<16x1xi32> to vector<16x64xi32>
    %41 = arith.cmpi eq, %31, %40 : vector<16x64xi32>
    %42 = arith.extui %41 : vector<16x64xi1> to vector<16x64xi32>
    %43 = arith.sitofp %42 : vector<16x64xi32> to vector<16x64xf32>
    %cst_27 = arith.constant dense<0.000000e+00> : vector<16x10xf32>
    %44 = tpu.matmul %43, %23, %cst_27 {dimension_numbers = #tpu.dot_dimension_numbers<[1], [0], [0], [1], [0, 0, 1, 1], [], []>} : vector<16x64xf32>, vector<64x10xf32>, vector<16x10xf32> -> vector<16x10xf32>
    %45 = arith.truncf %44 : vector<16x10xf32> to vector<16x10xbf16>
    %c0_28 = arith.constant 0 : index
    %c0_29 = arith.constant 0 : index
    %46 = vector.load %arg11[%c0_28, %c0_29] : memref<10x32xbf16, #tpu.memory_space<vmem>>, vector<10x32xbf16>
    %cst_30 = arith.constant dense<0.000000e+00> : vector<16x32xf32>
    %47 = tpu.matmul %45, %46, %cst_30 {dimension_numbers = #tpu.dot_dimension_numbers<[1], [0], [0], [1], [0, 0, 1, 1], [], []>} : vector<16x10xbf16>, vector<10x32xbf16>, vector<16x32xf32> -> vector<16x32xf32>
    %c0_31 = arith.constant 0 : index
    %c0_32 = arith.constant 0 : index
    %48 = vector.load %arg12[%c0_31, %c0_32] : memref<1x32xf32, #tpu.memory_space<vmem>>, vector<1x32xf32>
    %49 = vector.broadcast %48 : vector<1x32xf32> to vector<16x32xf32>
    %50 = arith.addf %47, %49 : vector<16x32xf32>
    %cst_33 = arith.constant 0.000000e+00 : f32
    %51 = vector.broadcast %cst_33 : f32 to vector<16x32xf32>
    %52 = arith.maximumf %50, %51 : vector<16x32xf32>
    %53 = arith.truncf %52 : vector<16x32xf32> to vector<16x32xbf16>
    %c0_34 = arith.constant 0 : index
    %c0_35 = arith.constant 0 : index
    %54 = vector.load %arg13[%c0_34, %c0_35] : memref<32x64xbf16, #tpu.memory_space<vmem>>, vector<32x64xbf16>
    %cst_36 = arith.constant dense<0.000000e+00> : vector<16x64xf32>
    %55 = tpu.matmul %53, %54, %cst_36 {dimension_numbers = #tpu.dot_dimension_numbers<[1], [0], [0], [1], [0, 0, 1, 1], [], []>} : vector<16x32xbf16>, vector<32x64xbf16>, vector<16x64xf32> -> vector<16x64xf32>
    %c0_37 = arith.constant 0 : index
    %c0_38 = arith.constant 0 : index
    %56 = vector.load %arg14[%c0_37, %c0_38] : memref<1x64xf32, #tpu.memory_space<vmem>>, vector<1x64xf32>
    %57 = vector.broadcast %56 : vector<1x64xf32> to vector<16x64xf32>
    %58 = arith.addf %55, %57 : vector<16x64xf32>
    %cst_39 = arith.constant 0.000000e+00 : f32
    %59 = vector.broadcast %cst_39 : f32 to vector<16x64xf32>
    %60 = arith.maximumf %58, %59 : vector<16x64xf32>
    %61 = arith.truncf %60 : vector<16x64xf32> to vector<16x64xbf16>
    %c0_40 = arith.constant 0 : index
    %c0_41 = arith.constant 0 : index
    %62 = vector.load %arg15[%c0_40, %c0_41] : memref<64x784xbf16, #tpu.memory_space<vmem>>, vector<64x784xbf16>
    %cst_42 = arith.constant dense<0.000000e+00> : vector<16x784xf32>
    %63 = tpu.matmul %61, %62, %cst_42 {dimension_numbers = #tpu.dot_dimension_numbers<[1], [0], [0], [1], [0, 0, 1, 1], [], []>} : vector<16x64xbf16>, vector<64x784xbf16>, vector<16x784xf32> -> vector<16x784xf32>
    %c0_43 = arith.constant 0 : index
    %c0_44 = arith.constant 0 : index
    %64 = vector.load %arg16[%c0_43, %c0_44] : memref<1x784xf32, #tpu.memory_space<vmem>>, vector<1x784xf32>
    %65 = vector.broadcast %64 : vector<1x784xf32> to vector<16x784xf32>
    %66 = arith.addf %63, %65 : vector<16x784xf32>
    %cst_45 = arith.constant 0.000000e+00 : f32
    %67 = vector.broadcast %cst_45 : f32 to vector<16x784xf32>
    %68 = arith.subf %67, %66 : vector<16x784xf32>
    %69 = math.exp %68 : vector<16x784xf32>
    %cst_46 = arith.constant 1.000000e+00 : f32
    %70 = vector.broadcast %cst_46 : f32 to vector<16x784xf32>
    %71 = arith.addf %70, %69 : vector<16x784xf32>
    %cst_47 = arith.constant 1.000000e+00 : f32
    %72 = vector.broadcast %cst_47 : f32 to vector<16x784xf32>
    %73 = arith.divf %72, %71 : vector<16x784xf32>
    %74 = arith.truncf %73 : vector<16x784xf32> to vector<16x784xbf16>
    %cst_48 = arith.constant 0.000000e+00 : bf16
    %75 = vector.broadcast %cst_48 : bf16 to vector<16x92xbf16>
    %76 = arith.truncf %22 : vector<16x10xf32> to vector<16x10xbf16>
    %77 = arith.truncf %44 : vector<16x10xf32> to vector<16x10xbf16>
    %78 = tpu.concatenate %74, %76, %77, %75 in 1 : vector<16x784xbf16>, vector<16x10xbf16>, vector<16x10xbf16>, vector<16x92xbf16> -> vector<16x896xbf16>
    %c0_49 = arith.constant 0 : index
    %c0_50 = arith.constant 0 : index
    %79 = vector.load %arg17[%c0_49, %c0_50] : memref<16x896xbf16, #tpu.memory_space<vmem>>, vector<16x896xbf16>
    tpu.vector_store %arg17[%c0_49, %c0_50], %78 {strides = array<i32>} : memref<16x896xbf16, #tpu.memory_space<vmem>>, vector<16x896xbf16>,
    return
  }
  func.func @transform_0(%arg0: i32) -> (i32, i32) {
    %c0_i32 = arith.constant 0 : i32
    %c0_i32_0 = arith.constant 0 : i32
    return %arg0, %c0_i32 : i32, i32
  }
  func.func @transform_1(%arg0: i32) -> (i32, i32) {
    %c0_i32 = arith.constant 0 : i32
    %c0_i32_0 = arith.constant 0 : i32
    %c0_i32_1 = arith.constant 0 : i32
    return %c0_i32, %c0_i32_0 : i32, i32
  }
  func.func @transform_2(%arg0: i32) -> (i32, i32) {
    %c0_i32 = arith.constant 0 : i32
    %c0_i32_0 = arith.constant 0 : i32
    %c0_i32_1 = arith.constant 0 : i32
    return %c0_i32, %c0_i32_0 : i32, i32
  }
  func.func @transform_3(%arg0: i32) -> (i32, i32) {
    %c0_i32 = arith.constant 0 : i32
    %c0_i32_0 = arith.constant 0 : i32
    %c0_i32_1 = arith.constant 0 : i32
    return %c0_i32, %c0_i32_0 : i32, i32
  }
  func.func @transform_4(%arg0: i32) -> (i32, i32) {
    %c0_i32 = arith.constant 0 : i32
    %c0_i32_0 = arith.constant 0 : i32
    %c0_i32_1 = arith.constant 0 : i32
    return %c0_i32, %c0_i32_0 : i32, i32
  }
  func.func @transform_5(%arg0: i32) -> (i32, i32) {
    %c0_i32 = arith.constant 0 : i32
    %c0_i32_0 = arith.constant 0 : i32
    %c0_i32_1 = arith.constant 0 : i32
    return %c0_i32, %c0_i32_0 : i32, i32
  }
  func.func @transform_6(%arg0: i32) -> (i32, i32) {
    %c0_i32 = arith.constant 0 : i32
    %c0_i32_0 = arith.constant 0 : i32
    %c0_i32_1 = arith.constant 0 : i32
    return %c0_i32, %c0_i32_0 : i32, i32
  }
  func.func @transform_7(%arg0: i32) -> (i32, i32) {
    %c0_i32 = arith.constant 0 : i32
    %c0_i32_0 = arith.constant 0 : i32
    %c0_i32_1 = arith.constant 0 : i32
    return %c0_i32, %c0_i32_0 : i32, i32
  }
  func.func @transform_8(%arg0: i32) -> (i32, i32) {
    %c0_i32 = arith.constant 0 : i32
    %c0_i32_0 = arith.constant 0 : i32
    %c0_i32_1 = arith.constant 0 : i32
    return %c0_i32, %c0_i32_0 : i32, i32
  }
  func.func @transform_9(%arg0: i32) -> (i32, i32) {
    %c0_i32 = arith.constant 0 : i32
    %c0_i32_0 = arith.constant 0 : i32
    %c0_i32_1 = arith.constant 0 : i32
    return %c0_i32, %c0_i32_0 : i32, i32
  }
  func.func @transform_10(%arg0: i32) -> (i32, i32) {
    %c0_i32 = arith.constant 0 : i32
    %c0_i32_0 = arith.constant 0 : i32
    %c0_i32_1 = arith.constant 0 : i32
    return %c0_i32, %c0_i32_0 : i32, i32
  }
  func.func @transform_11(%arg0: i32) -> (i32, i32) {
    %c0_i32 = arith.constant 0 : i32
    %c0_i32_0 = arith.constant 0 : i32
    %c0_i32_1 = arith.constant 0 : i32
    return %c0_i32, %c0_i32_0 : i32, i32
  }
  func.func @transform_12(%arg0: i32) -> (i32, i32) {
    %c0_i32 = arith.constant 0 : i32
    %c0_i32_0 = arith.constant 0 : i32
    %c0_i32_1 = arith.constant 0 : i32
    return %c0_i32, %c0_i32_0 : i32, i32
  }
  func.func @transform_13(%arg0: i32) -> (i32, i32) {
    %c0_i32 = arith.constant 0 : i32
    %c0_i32_0 = arith.constant 0 : i32
    %c0_i32_1 = arith.constant 0 : i32
    return %c0_i32, %c0_i32_0 : i32, i32
  }
  func.func @transform_14(%arg0: i32) -> (i32, i32) {
    %c0_i32 = arith.constant 0 : i32
    %c0_i32_0 = arith.constant 0 : i32
    %c0_i32_1 = arith.constant 0 : i32
    return %c0_i32, %c0_i32_0 : i32, i32
  }
  func.func @transform_15(%arg0: i32) -> (i32, i32) {
    %c0_i32 = arith.constant 0 : i32
    %c0_i32_0 = arith.constant 0 : i32
    %c0_i32_1 = arith.constant 0 : i32
    return %c0_i32, %c0_i32_0 : i32, i32
  }
  func.func @transform_16(%arg0: i32) -> (i32, i32) {
    %c0_i32 = arith.constant 0 : i32
    %c0_i32_0 = arith.constant 0 : i32
    return %arg0, %c0_i32 : i32, i32
  }
}

</mosaic_0001>

<llo_original>
// kernel: vqvae_forward.1
$region0: #{vqvae_forward.1}
  #allocation0 [shape = 'u32[]', space=smem, size = 0x4, offset = 0x4, fixed_abs, tag = 'smem constant byte address 0x4 - core index']
  #allocation1 [shape = 'u32[144,128]{1,0:T(1,128)}', space=vmem, size = 0x12000, scoped, tag = 'internal scratch']
  %s0 = inlined_call_operand.vmem [shape: f32[16,784], index: 0, kind: input, shape index: {}]
  %s1 = inlined_call_operand.vmem [shape: bf16[784,64], index: 1, kind: input, shape index: {}]
  %s2 = inlined_call_operand.vmem [shape: f32[1,64], index: 2, kind: input, shape index: {}]
  %s3 = inlined_call_operand.vmem [shape: bf16[64,32], index: 3, kind: input, shape index: {}]
  %s4 = inlined_call_operand.vmem [shape: f32[1,32], index: 4, kind: input, shape index: {}]
  %s5 = inlined_call_operand.vmem [shape: bf16[32,10], index: 5, kind: input, shape index: {}]
  %s6 = inlined_call_operand.vmem [shape: f32[1,10], index: 6, kind: input, shape index: {}]
  %s7 = inlined_call_operand.vmem [shape: f32[64,10], index: 7, kind: input, shape index: {}]
  %s8 = inlined_call_operand.vmem [shape: f32[10,64], index: 8, kind: input, shape index: {}]
  %s9 = inlined_call_operand.vmem [shape: f32[1,64], index: 9, kind: input, shape index: {}]
  %s10 = inlined_call_operand.vmem [shape: bf16[10,32], index: 10, kind: input, shape index: {}]
  %s11 = inlined_call_operand.vmem [shape: f32[1,32], index: 11, kind: input, shape index: {}]
  %s12 = inlined_call_operand.vmem [shape: bf16[32,64], index: 12, kind: input, shape index: {}]
  %s13 = inlined_call_operand.vmem [shape: f32[1,64], index: 13, kind: input, shape index: {}]
  %s14 = inlined_call_operand.vmem [shape: bf16[64,784], index: 14, kind: input, shape index: {}]
  %s15 = inlined_call_operand.vmem [shape: f32[1,784], index: 15, kind: input, shape index: {}]
  %s16 = inlined_call_operand.vmem [shape: bf16[16,896], index: 16, kind: output, shape index: {}]
  %s17 = sld [smem:[#allocation0]]
  $region74: #{vqvae_forward.1} parent=0
    _
  %s19 = ssub.s32 1, %s17
  %s20 = scalar_select 0, %s19, %s17
  // Predicated region
  $region2: #{vqvae_forward.1} parent=0 // pred_check
    _
  $region3: #{vqvae_forward.1} parent=0 // pred_check_branch
    %22 = sbr.rel (0) target = $region5
  $region4: #{vqvae_forward.1} parent=0 // pred_region
    _
  $region5: #{vqvae_forward.1} parent=0 // pred_fallthru
    _
  // Predicated region
  $region6: #{vqvae_forward.1} parent=0 // pred_check
    _
  $region7: #{vqvae_forward.1} parent=0 // pred_check_branch
    %24 = sbr.rel (0) target = $region9
  $region8: #{vqvae_forward.1} parent=0 // pred_region
    _
  $region9: #{vqvae_forward.1} parent=0 // pred_fallthru
    _
  // Predicated region
  $region10: #{vqvae_forward.1} parent=0 // pred_check
    _
  $region11: #{vqvae_forward.1} parent=0 // pred_check_branch
    %26 = sbr.rel (0) target = $region13
  $region12: #{vqvae_forward.1} parent=0 // pred_region
    _
  $region13: #{vqvae_forward.1} parent=0 // pred_fallthru
    _
  // Predicated region
  $region14: #{vqvae_forward.1} parent=0 // pred_check
    _
  $region15: #{vqvae_forward.1} parent=0 // pred_check_branch
    %28 = sbr.rel (0) target = $region17
  $region16: #{vqvae_forward.1} parent=0 // pred_region
    _
  $region17: #{vqvae_forward.1} parent=0 // pred_fallthru
    _
  // Predicated region
  $region18: #{vqvae_forward.1} parent=0 // pred_check
    _
  $region19: #{vqvae_forward.1} parent=0 // pred_check_branch
    %30 = sbr.rel (0) target = $region21
  $region20: #{vqvae_forward.1} parent=0 // pred_region
    _
  $region21: #{vqvae_forward.1} parent=0 // pred_fallthru
    _
  // Predicated region
  $region22: #{vqvae_forward.1} parent=0 // pred_check
    _
  $region23: #{vqvae_forward.1} parent=0 // pred_check_branch
    %32 = sbr.rel (0) target = $region25
  $region24: #{vqvae_forward.1} parent=0 // pred_region
    _
  $region25: #{vqvae_forward.1} parent=0 // pred_fallthru
    _
  // Predicated region
  $region26: #{vqvae_forward.1} parent=0 // pred_check
    _
  $region27: #{vqvae_forward.1} parent=0 // pred_check_branch
    %34 = sbr.rel (0) target = $region29
  $region28: #{vqvae_forward.1} parent=0 // pred_region
    _
  $region29: #{vqvae_forward.1} parent=0 // pred_fallthru
    _
  // Predicated region
  $region30: #{vqvae_forward.1} parent=0 // pred_check
    _
  $region31: #{vqvae_forward.1} parent=0 // pred_check_branch
    %36 = sbr.rel (0) target = $region33
  $region32: #{vqvae_forward.1} parent=0 // pred_region
    _
  $region33: #{vqvae_forward.1} parent=0 // pred_fallthru
    _
  // Predicated region
  $region34: #{vqvae_forward.1} parent=0 // pred_check
    _
  $region35: #{vqvae_forward.1} parent=0 // pred_check_branch
    %38 = sbr.rel (0) target = $region37
  $region36: #{vqvae_forward.1} parent=0 // pred_region
    _
  $region37: #{vqvae_forward.1} parent=0 // pred_fallthru
    _
  // Predicated region
  $region38: #{vqvae_forward.1} parent=0 // pred_check
    _
  $region39: #{vqvae_forward.1} parent=0 // pred_check_branch
    %40 = sbr.rel (0) target = $region41
  $region40: #{vqvae_forward.1} parent=0 // pred_region
    _
  $region41: #{vqvae_forward.1} parent=0 // pred_fallthru
    _
  // Predicated region
  $region42: #{vqvae_forward.1} parent=0 // pred_check
    _
  $region43: #{vqvae_forward.1} parent=0 // pred_check_branch
    %42 = sbr.rel (0) target = $region45
  $region44: #{vqvae_forward.1} parent=0 // pred_region
    _
  $region45: #{vqvae_forward.1} parent=0 // pred_fallthru
    _
  // Predicated region
  $region46: #{vqvae_forward.1} parent=0 // pred_check
    _
  $region47: #{vqvae_forward.1} parent=0 // pred_check_branch
    %44 = sbr.rel (0) target = $region49
  $region48: #{vqvae_forward.1} parent=0 // pred_region
    _
  $region49: #{vqvae_forward.1} parent=0 // pred_fallthru
    _
  // Predicated region
  $region50: #{vqvae_forward.1} parent=0 // pred_check
    _
  $region51: #{vqvae_forward.1} parent=0 // pred_check_branch
    %46 = sbr.rel (0) target = $region53
  $region52: #{vqvae_forward.1} parent=0 // pred_region
    _
  $region53: #{vqvae_forward.1} parent=0 // pred_fallthru
    _
  // Predicated region
  $region54: #{vqvae_forward.1} parent=0 // pred_check
    _
  $region55: #{vqvae_forward.1} parent=0 // pred_check_branch
    %48 = sbr.rel (0) target = $region57
  $region56: #{vqvae_forward.1} parent=0 // pred_region
    _
  $region57: #{vqvae_forward.1} parent=0 // pred_fallthru
    _
  // Predicated region
  $region58: #{vqvae_forward.1} parent=0 // pred_check
    _
  $region59: #{vqvae_forward.1} parent=0 // pred_check_branch
    %50 = sbr.rel (0) target = $region61
  $region60: #{vqvae_forward.1} parent=0 // pred_region
    _
  $region61: #{vqvae_forward.1} parent=0 // pred_fallthru
    _
  // Predicated region
  $region62: #{vqvae_forward.1} parent=0 // pred_check
    _
  $region63: #{vqvae_forward.1} parent=0 // pred_check_branch
    %52 = sbr.rel (0) target = $region65
  $region64: #{vqvae_forward.1} parent=0 // pred_region
    _
  $region65: #{vqvae_forward.1} parent=0 // pred_fallthru
    _
  %v54 = vld [vmem:[%s0] sm:$0xff]
  %v55 = vld [vmem:[%s0 + $0x8] sm:$0xff]
  %v56 = vld [vmem:[%s0 + $0x10] sm:$0xff]
  %v57 = vld [vmem:[%s0 + $0x18] sm:$0xff]
  %v58 = vld [vmem:[%s0 + $0x20] sm:$0xff]
  %v59 = vld [vmem:[%s0 + $0x28] sm:$0xff]
  %v60 = vld [vmem:[%s0 + $0x30] sm:$0xff]
  %v61 = vld [vmem:[%s0 + $0x38] sm:$0xff]
  %v62 = vld [vmem:[%s0 + $0x40] sm:$0xff]
  %v63 = vld [vmem:[%s0 + $0x48] sm:$0xff]
  %v64 = vld [vmem:[%s0 + $0x50] sm:$0xff]
  %v65 = vld [vmem:[%s0 + $0x58] sm:$0xff]
  %v66 = vld [vmem:[%s0 + $0x60] sm:$0xff]
  %v67 = vld [vmem:[%s0 + $0x68] sm:$0xff]
  %v68 = vpack.c.bf16 %v61, %v54
  %v69 = vpack.c.bf16 %v62, %v55
  %v70 = vpack.c.bf16 %v63, %v56
  %v71 = vpack.c.bf16 %v64, %v57
  %v72 = vpack.c.bf16 %v65, %v58
  %v73 = vpack.c.bf16 %v66, %v59
  %v74 = vpack.c.bf16 %v67, %v60
  %v75 = vld [vmem:[%s1] sm:$0xf]
  %v76 = vld [vmem:[%s1 + $0x4] sm:$0xf]
  %v77 = vld [vmem:[%s1 + $0x8] sm:$0xf]
  %v78 = vld [vmem:[%s1 + $0xc] sm:$0xf]
  %v79 = vld [vmem:[%s1 + $0x10] sm:$0xf]
  %v80 = vld [vmem:[%s1 + $0x14] sm:$0xf]
  %v81 = vld [vmem:[%s1 + $0x18] sm:$0xf]
  %v82 = vld [vmem:[%s1 + $0x1c] sm:$0xf]
  %v83 = vld [vmem:[%s1 + $0x20] sm:$0xf]
  %v84 = vld [vmem:[%s1 + $0x24] sm:$0xf]
  %v85 = vld [vmem:[%s1 + $0x28] sm:$0xf]
  %v86 = vld [vmem:[%s1 + $0x2c] sm:$0xf]
  %v87 = vld [vmem:[%s1 + $0x30] sm:$0xf]
  %v88 = vld [vmem:[%s1 + $0x34] sm:$0xf]
  %v89 = vld [vmem:[%s1 + $0x38] sm:$0xf]
  %v90 = vld [vmem:[%s1 + $0x3c] sm:$0xf]
  %v91 = vld [vmem:[%s1 + $0x40] sm:$0xf]
  %v92 = vld [vmem:[%s1 + $0x44] sm:$0xf]
  %v93 = vld [vmem:[%s1 + $0x48] sm:$0xf]
  %v94 = vld [vmem:[%s1 + $0x4c] sm:$0xf]
  %v95 = vld [vmem:[%s1 + $0x50] sm:$0xf]
  %v96 = vld [vmem:[%s1 + $0x54] sm:$0xf]
  %v97 = vld [vmem:[%s1 + $0x58] sm:$0xf]
  %v98 = vld [vmem:[%s1 + $0x5c] sm:$0xf]
  %v99 = vld [vmem:[%s1 + $0x60] sm:$0xf]
  %v100 = vld [vmem:[%s1 + $0x64] sm:$0xf]
  %v101 = vld [vmem:[%s1 + $0x68] sm:$0xf]
  %v102 = vld [vmem:[%s1 + $0x6c] sm:$0xf]
  %v103 = vld [vmem:[%s1 + $0x70] sm:$0xf]
  %v104 = vld [vmem:[%s1 + $0x74] sm:$0xf]
  %v105 = vld [vmem:[%s1 + $0x78] sm:$0xf]
  %v106 = vld [vmem:[%s1 + $0x7c] sm:$0xf]
  %v107 = vld [vmem:[%s1 + $0x80] sm:$0xf]
  %v108 = vld [vmem:[%s1 + $0x84] sm:$0xf]
  %v109 = vld [vmem:[%s1 + $0x88] sm:$0xf]
  %v110 = vld [vmem:[%s1 + $0x8c] sm:$0xf]
  %v111 = vld [vmem:[%s1 + $0x90] sm:$0xf]
  %v112 = vld [vmem:[%s1 + $0x94] sm:$0xf]
  %v113 = vld [vmem:[%s1 + $0x98] sm:$0xf]
  %v114 = vld [vmem:[%s1 + $0x9c] sm:$0xf]
  %v115 = vld [vmem:[%s1 + $0xa0] sm:$0xf]
  %v116 = vld [vmem:[%s1 + $0xa4] sm:$0xf]
  %v117 = vld [vmem:[%s1 + $0xa8] sm:$0xf]
  %v118 = vld [vmem:[%s1 + $0xac] sm:$0xf]
  %v119 = vld [vmem:[%s1 + $0xb0] sm:$0xf]
  %v120 = vld [vmem:[%s1 + $0xb4] sm:$0xf]
  %v121 = vld [vmem:[%s1 + $0xb8] sm:$0xf]
  %v122 = vld [vmem:[%s1 + $0xbc] sm:$0xf]
  %v123 = vld [vmem:[%s1 + $0xc0] sm:$0xf]
  %v124 = vld [vmem:[%s1 + $0xc4] sm:$0xf]
  %v125 = vld [vmem:[%s1 + $0xc8] sm:$0xf]
  %v126 = vld [vmem:[%s1 + $0xcc] sm:$0xf]
  %v127 = vld [vmem:[%s1 + $0xd0] sm:$0xf]
  %v128 = vld [vmem:[%s1 + $0xd4] sm:$0xf]
  %v129 = vld [vmem:[%s1 + $0xd8] sm:$0xf]
  %v130 = vld [vmem:[%s1 + $0xdc] sm:$0xf]
  %v131 = vld [vmem:[%s1 + $0xe0] sm:$0xf]
  %v132 = vld [vmem:[%s1 + $0xe4] sm:$0xf]
  %v133 = vld [vmem:[%s1 + $0xe8] sm:$0xf]
  %v134 = vld [vmem:[%s1 + $0xec] sm:$0xf]
  %v135 = vld [vmem:[%s1 + $0xf0] sm:$0xf]
  %v136 = vld [vmem:[%s1 + $0xf4] sm:$0xf]
  %v137 = vld [vmem:[%s1 + $0xf8] sm:$0xf]
  %v138 = vld [vmem:[%s1 + $0xfc] sm:$0xf]
  %v139 = vld [vmem:[%s1 + $0x100] sm:$0xf]
  %v140 = vld [vmem:[%s1 + $0x104] sm:$0xf]
  %v141 = vld [vmem:[%s1 + $0x108] sm:$0xf]
  %v142 = vld [vmem:[%s1 + $0x10c] sm:$0xf]
  %v143 = vld [vmem:[%s1 + $0x110] sm:$0xf]
  %v144 = vld [vmem:[%s1 + $0x114] sm:$0xf]
  %v145 = vld [vmem:[%s1 + $0x118] sm:$0xf]
  %v146 = vld [vmem:[%s1 + $0x11c] sm:$0xf]
  %v147 = vld [vmem:[%s1 + $0x120] sm:$0xf]
  %v148 = vld [vmem:[%s1 + $0x124] sm:$0xf]
  %v149 = vld [vmem:[%s1 + $0x128] sm:$0xf]
  %v150 = vld [vmem:[%s1 + $0x12c] sm:$0xf]
  %v151 = vld [vmem:[%s1 + $0x130] sm:$0xf]
  %v152 = vld [vmem:[%s1 + $0x134] sm:$0xf]
  %v153 = vld [vmem:[%s1 + $0x138] sm:$0xf]
  %v154 = vld [vmem:[%s1 + $0x13c] sm:$0xf]
  %v155 = vld [vmem:[%s1 + $0x140] sm:$0xf]
  %v156 = vld [vmem:[%s1 + $0x144] sm:$0xf]
  %v157 = vld [vmem:[%s1 + $0x148] sm:$0xf]
  %v158 = vld [vmem:[%s1 + $0x14c] sm:$0xf]
  %v159 = vld [vmem:[%s1 + $0x150] sm:$0xf]
  %v160 = vld [vmem:[%s1 + $0x154] sm:$0xf]
  %v161 = vld [vmem:[%s1 + $0x158] sm:$0xf]
  %v162 = vld [vmem:[%s1 + $0x15c] sm:$0xf]
  %v163 = vld [vmem:[%s1 + $0x160] sm:$0xf]
  %v164 = vld [vmem:[%s1 + $0x164] sm:$0xf]
  %v165 = vld [vmem:[%s1 + $0x168] sm:$0xf]
  %v166 = vld [vmem:[%s1 + $0x16c] sm:$0xf]
  %v167 = vld [vmem:[%s1 + $0x170] sm:$0xf]
  %v168 = vld [vmem:[%s1 + $0x174] sm:$0xf]
  %v169 = vld [vmem:[%s1 + $0x178] sm:$0xf]
  %v170 = vld [vmem:[%s1 + $0x17c] sm:$0xf]
  %v171 = vld [vmem:[%s1 + $0x180] sm:$0xf]
  %v172 = vld [vmem:[%s1 + $0x184] sm:$0xf]
  %v173 = vld [vmem:[%s2] sm:$0x1]
  %v175 = vlaneseq
  %v176 = vshrl.u32 %v175, 7
  %v177 = vsub.s32 0, %v176
  %v178 = vrot.slane %v173, %v177
  %v278 = vunpack.c.l.b16 %v75
  %v279 = vunpack.c.l.b16 %v76
  %v280 = vunpack.c.l.b16 %v77
  %v281 = vunpack.c.l.b16 %v78
  %v282 = vunpack.c.l.b16 %v79
  %v283 = vunpack.c.l.b16 %v80
  %v284 = vunpack.c.l.b16 %v81
  %v285 = vunpack.c.l.b16 %v82
  %v286 = vunpack.c.l.b16 %v83
  %v287 = vunpack.c.l.b16 %v84
  %v288 = vunpack.c.l.b16 %v85
  %v289 = vunpack.c.l.b16 %v86
  %v290 = vunpack.c.l.b16 %v87
  %v291 = vunpack.c.l.b16 %v88
  %v292 = vunpack.c.l.b16 %v89
  %v293 = vunpack.c.l.b16 %v90
  %v294 = vunpack.c.l.b16 %v91
  %v295 = vunpack.c.l.b16 %v92
  %v296 = vunpack.c.l.b16 %v93
  %v297 = vunpack.c.l.b16 %v94
  %v298 = vunpack.c.l.b16 %v95
  %v299 = vunpack.c.l.b16 %v96
  %v300 = vunpack.c.l.b16 %v97
  %v301 = vunpack.c.l.b16 %v98
  %v302 = vunpack.c.l.b16 %v99
  %v303 = vunpack.c.l.b16 %v100
  %v304 = vunpack.c.l.b16 %v101
  %v305 = vunpack.c.l.b16 %v102
  %v306 = vunpack.c.l.b16 %v103
  %v307 = vunpack.c.l.b16 %v104
  %v308 = vunpack.c.l.b16 %v105
  %v309 = vunpack.c.l.b16 %v106
  %v310 = vunpack.c.l.b16 %v107
  %v311 = vunpack.c.l.b16 %v108
  %v312 = vunpack.c.l.b16 %v109
  %v313 = vunpack.c.l.b16 %v110
  %v314 = vunpack.c.l.b16 %v111
  %v315 = vunpack.c.l.b16 %v112
  %v316 = vunpack.c.l.b16 %v113
  %v317 = vunpack.c.l.b16 %v114
  %v318 = vunpack.c.l.b16 %v115
  %v319 = vunpack.c.l.b16 %v116
  %v320 = vunpack.c.l.b16 %v117
  %v321 = vunpack.c.l.b16 %v118
  %v322 = vunpack.c.l.b16 %v119
  %v323 = vunpack.c.l.b16 %v120
  %v324 = vunpack.c.l.b16 %v121
  %v325 = vunpack.c.l.b16 %v122
  %v326 = vunpack.c.l.b16 %v123
  %v327 = vunpack.c.l.b16 %v124
  %v328 = vunpack.c.l.b16 %v125
  %v329 = vunpack.c.l.b16 %v126
  %v330 = vunpack.c.l.b16 %v127
  %v331 = vunpack.c.l.b16 %v128
  %v332 = vunpack.c.l.b16 %v129
  %v333 = vunpack.c.l.b16 %v130
  %v334 = vunpack.c.l.b16 %v131
  %v335 = vunpack.c.l.b16 %v132
  %v336 = vunpack.c.l.b16 %v133
  %v337 = vunpack.c.l.b16 %v134
  %v338 = vunpack.c.l.b16 %v135
  %v339 = vunpack.c.l.b16 %v136
  %v340 = vunpack.c.l.b16 %v137
  %v341 = vunpack.c.l.b16 %v138
  %v342 = vunpack.c.l.b16 %v139
  %v343 = vunpack.c.l.b16 %v140
  %v344 = vunpack.c.l.b16 %v141
  %v345 = vunpack.c.l.b16 %v142
  %v346 = vunpack.c.l.b16 %v143
  %v347 = vunpack.c.l.b16 %v144
  %v348 = vunpack.c.l.b16 %v145
  %v349 = vunpack.c.l.b16 %v146
  %v350 = vunpack.c.l.b16 %v147
  %v351 = vunpack.c.l.b16 %v148
  %v352 = vunpack.c.l.b16 %v149
  %v353 = vunpack.c.l.b16 %v150
  %v354 = vunpack.c.l.b16 %v151
  %v355 = vunpack.c.l.b16 %v152
  %v356 = vunpack.c.l.b16 %v153
  %v357 = vunpack.c.l.b16 %v154
  %v358 = vunpack.c.l.b16 %v155
  %v359 = vunpack.c.l.b16 %v156
  %v360 = vunpack.c.l.b16 %v157
  %v361 = vunpack.c.l.b16 %v158
  %v362 = vunpack.c.l.b16 %v159
  %v363 = vunpack.c.l.b16 %v160
  %v364 = vunpack.c.l.b16 %v161
  %v365 = vunpack.c.l.b16 %v162
  %v366 = vunpack.c.l.b16 %v163
  %v367 = vunpack.c.l.b16 %v164
  %v368 = vunpack.c.l.b16 %v165
  %v369 = vunpack.c.l.b16 %v166
  %v370 = vunpack.c.l.b16 %v167
  %v371 = vunpack.c.l.b16 %v168
  %v372 = vunpack.c.l.b16 %v169
  %v373 = vunpack.c.l.b16 %v170
  %v374 = vunpack.c.l.b16 %v171
  %v375 = vunpack.c.l.b16 %v172
  %v376 = vpack.c.b16 %v279, %v278
  %v377 = vpack.c.b16 %v281, %v280
  %v378 = vpack.c.b16 %v283, %v282
  %v379 = vpack.c.b16 %v285, %v284
  %v380 = vpack.c.b16 %v287, %v286
  %v381 = vpack.c.b16 %v289, %v288
  %v382 = vpack.c.b16 %v291, %v290
  %v383 = vpack.c.b16 %v293, %v292
  %v384 = vpack.c.b16 %v295, %v294
  %v385 = vpack.c.b16 %v297, %v296
  %v386 = vpack.c.b16 %v299, %v298
  %v387 = vpack.c.b16 %v301, %v300
  %v388 = vpack.c.b16 %v303, %v302
  %v389 = vpack.c.b16 %v305, %v304
  %v390 = vpack.c.b16 %v307, %v306
  %v391 = vpack.c.b16 %v309, %v308
  %v392 = vpack.c.b16 %v311, %v310
  %v393 = vpack.c.b16 %v313, %v312
  %v394 = vpack.c.b16 %v315, %v314
  %v395 = vpack.c.b16 %v317, %v316
  %v396 = vpack.c.b16 %v319, %v318
  %v397 = vpack.c.b16 %v321, %v320
  %v398 = vpack.c.b16 %v323, %v322
  %v399 = vpack.c.b16 %v325, %v324
  %v400 = vpack.c.b16 %v327, %v326
  %v401 = vpack.c.b16 %v329, %v328
  %v402 = vpack.c.b16 %v331, %v330
  %v403 = vpack.c.b16 %v333, %v332
  %v404 = vpack.c.b16 %v335, %v334
  %v405 = vpack.c.b16 %v337, %v336
  %v406 = vpack.c.b16 %v339, %v338
  %v407 = vpack.c.b16 %v341, %v340
  %v408 = vpack.c.b16 %v343, %v342
  %v409 = vpack.c.b16 %v345, %v344
  %v410 = vpack.c.b16 %v347, %v346
  %v411 = vpack.c.b16 %v349, %v348
  %v412 = vpack.c.b16 %v351, %v350
  %v413 = vpack.c.b16 %v353, %v352
  %v414 = vpack.c.b16 %v355, %v354
  %v415 = vpack.c.b16 %v357, %v356
  %v416 = vpack.c.b16 %v359, %v358
  %v417 = vpack.c.b16 %v361, %v360
  %v418 = vpack.c.b16 %v363, %v362
  %v419 = vpack.c.b16 %v365, %v364
  %v420 = vpack.c.b16 %v367, %v366
  %v421 = vpack.c.b16 %v369, %v368
  %v422 = vpack.c.b16 %v371, %v370
  %v423 = vpack.c.b16 %v373, %v372
  %v424 = vpack.c.b16 %v375, %v374
  %vm474 = vcmask 130048
  %v476 = vsel %vm474, %v74, 0
  %478 = vmatprep.subr.bf16.mxu0 0
  %479 = vmatpush1.bf16.msra.mxu0 %v383
  %480 = vmatprep.subr.bf16.mxu0 0
  %481 = vmatpush1.bf16.msra.mxu0 %v382
  %482 = vmatprep.subr.bf16.mxu0 0
  %483 = vmatpush1.bf16.msra.mxu0 %v381
  %484 = vmatprep.subr.bf16.mxu0 0
  %485 = vmatpush1.bf16.msra.mxu0 %v380
  %486 = vmatprep.subr.bf16.mxu0 0
  %487 = vmatpush1.bf16.msra.mxu0 %v379
  %488 = vmatprep.subr.bf16.mxu0 0
  %489 = vmatpush1.bf16.msra.mxu0 %v378
  %490 = vmatprep.subr.bf16.mxu0 0
  %491 = vmatpush1.bf16.msra.mxu0 %v377
  %492 = vmatprep.subr.bf16.mxu0 0
  %493 = vmatpush1.bf16.msra.mxu0 %v376
  %494 = vmatprep.subr.bf16.mxu0 0
  %495 = vmatpush2.bf16.msra.mxu0 %v391
  %496 = vmatprep.subr.bf16.mxu0 0
  %497 = vmatpush2.bf16.msra.mxu0 %v390
  %498 = vmatprep.subr.bf16.mxu0 0
  %499 = vmatpush2.bf16.msra.mxu0 %v389
  %500 = vmatprep.subr.bf16.mxu0 0
  %501 = vmatpush2.bf16.msra.mxu0 %v388
  %502 = vmatprep.subr.bf16.mxu0 0
  %503 = vmatpush2.bf16.msra.mxu0 %v387
  %504 = vmatprep.subr.bf16.mxu0 0
  %505 = vmatpush2.bf16.msra.mxu0 %v386
  %506 = vmatprep.subr.bf16.mxu0 0
  %507 = vmatpush2.bf16.msra.mxu0 %v385
  %508 = vmatprep.subr.bf16.mxu0 0
  %509 = vmatpush2.bf16.msra.mxu0 %v384
  %510 = vmatprep.mubr.bf16.mxu0 %v69
  %511 = vmatmul.mubr.bf16.gmra.mxu0 %v68
  %v512 = vpop.f32.mrf.mxu0
  %v513 = vadd.f32 %v178, %v512
  %v514 = vpop.f32.mrf.mxu0
  %v515 = vpop.f32.mrf.mxu0
  %v516 = vadd.f32 %v178, %v515
  %v517 = vpop.f32.mrf.mxu0
  %518 = vdwg.mxu0
  %519 = vmatprep.subr.bf16.mxu0 0
  %520 = vmatpush1.bf16.msra.mxu0 %v399
  %521 = vmatprep.subr.bf16.mxu0 0
  %522 = vmatpush1.bf16.msra.mxu0 %v398
  %523 = vmatprep.subr.bf16.mxu0 0
  %524 = vmatpush1.bf16.msra.mxu0 %v397
  %525 = vmatprep.subr.bf16.mxu0 0
  %526 = vmatpush1.bf16.msra.mxu0 %v396
  %527 = vmatprep.subr.bf16.mxu0 0
  %528 = vmatpush1.bf16.msra.mxu0 %v395
  %529 = vmatprep.subr.bf16.mxu0 0
  %530 = vmatpush1.bf16.msra.mxu0 %v394
  %531 = vmatprep.subr.bf16.mxu0 0
  %532 = vmatpush1.bf16.msra.mxu0 %v393
  %533 = vmatprep.subr.bf16.mxu0 0
  %534 = vmatpush1.bf16.msra.mxu0 %v392
  %535 = vmatprep.subr.bf16.mxu0 0
  %536 = vmatpush2.bf16.msra.mxu0 %v407
  %537 = vmatprep.subr.bf16.mxu0 0
  %538 = vmatpush2.bf16.msra.mxu0 %v406
  %539 = vmatprep.subr.bf16.mxu0 0
  %540 = vmatpush2.bf16.msra.mxu0 %v405
  %541 = vmatprep.subr.bf16.mxu0 0
  %542 = vmatpush2.bf16.msra.mxu0 %v404
  %543 = vmatprep.subr.bf16.mxu0 0
  %544 = vmatpush2.bf16.msra.mxu0 %v403
  %545 = vmatprep.subr.bf16.mxu0 0
  %546 = vmatpush2.bf16.msra.mxu0 %v402
  %547 = vmatprep.subr.bf16.mxu0 0
  %548 = vmatpush2.bf16.msra.mxu0 %v401
  %549 = vmatprep.subr.bf16.mxu0 0
  %550 = vmatpush2.bf16.msra.mxu0 %v400
  %551 = vmatprep.mubr.bf16.mxu0 %v71
  %552 = vmatmul.mubr.bf16.gmra.mxu0 %v70
  %v553 = vpop.f32.mrf.mxu0
  %v554 = vadd.f32 %v513, %v553
  %v555 = vpop.f32.mrf.mxu0
  %v556 = vpop.f32.mrf.mxu0
  %v557 = vadd.f32 %v516, %v556
  %v558 = vpop.f32.mrf.mxu0
  %559 = vdwg.mxu0
  %560 = vmatprep.subr.bf16.mxu0 0
  %561 = vmatpush1.bf16.msra.mxu0 %v415
  %562 = vmatprep.subr.bf16.mxu0 0
  %563 = vmatpush1.bf16.msra.mxu0 %v414
  %564 = vmatprep.subr.bf16.mxu0 0
  %565 = vmatpush1.bf16.msra.mxu0 %v413
  %566 = vmatprep.subr.bf16.mxu0 0
  %567 = vmatpush1.bf16.msra.mxu0 %v412
  %568 = vmatprep.subr.bf16.mxu0 0
  %569 = vmatpush1.bf16.msra.mxu0 %v411
  %570 = vmatprep.subr.bf16.mxu0 0
  %571 = vmatpush1.bf16.msra.mxu0 %v410
  %572 = vmatprep.subr.bf16.mxu0 0
  %573 = vmatpush1.bf16.msra.mxu0 %v409
  %574 = vmatprep.subr.bf16.mxu0 0
  %575 = vmatpush1.bf16.msra.mxu0 %v408
  %576 = vmatprep.subr.bf16.mxu0 0
  %577 = vmatpush2.bf16.msra.mxu0 %v423
  %578 = vmatprep.subr.bf16.mxu0 0
  %579 = vmatpush2.bf16.msra.mxu0 %v422
  %580 = vmatprep.subr.bf16.mxu0 0
  %581 = vmatpush2.bf16.msra.mxu0 %v421
  %582 = vmatprep.subr.bf16.mxu0 0
  %583 = vmatpush2.bf16.msra.mxu0 %v420
  %584 = vmatprep.subr.bf16.mxu0 0
  %585 = vmatpush2.bf16.msra.mxu0 %v419
  %586 = vmatprep.subr.bf16.mxu0 0
  %587 = vmatpush2.bf16.msra.mxu0 %v418
  %588 = vmatprep.subr.bf16.mxu0 0
  %589 = vmatpush2.bf16.msra.mxu0 %v417
  %590 = vmatprep.subr.bf16.mxu0 0
  %591 = vmatpush2.bf16.msra.mxu0 %v416
  %592 = vmatprep.mubr.bf16.mxu0 %v73
  %593 = vmatmul.mubr.bf16.gmra.mxu0 %v72
  %v594 = vpop.f32.mrf.mxu0
  %v595 = vadd.f32 %v554, %v594
  %v596 = vpop.f32.mrf.mxu0
  %v597 = vpop.f32.mrf.mxu0
  %v598 = vadd.f32 %v557, %v597
  %v599 = vpop.f32.mrf.mxu0
  %600 = vdwg.mxu0
  %601 = vmatprep.subr.bf16.mxu0 0
  %602 = vmatpush1.bf16.msra.mxu0 0
  %603 = vmatprep.subr.bf16.mxu0 0
  %604 = vmatpush1.bf16.msra.mxu0 0
  %605 = vmatprep.subr.bf16.mxu0 0
  %606 = vmatpush1.bf16.msra.mxu0 0
  %607 = vmatprep.subr.bf16.mxu0 0
  %608 = vmatpush1.bf16.msra.mxu0 0
  %609 = vmatprep.subr.bf16.mxu0 0
  %610 = vmatpush1.bf16.msra.mxu0 0
  %611 = vmatprep.subr.bf16.mxu0 0
  %612 = vmatpush1.bf16.msra.mxu0 0
  %613 = vmatprep.subr.bf16.mxu0 0
  %614 = vmatpush1.bf16.msra.mxu0 0
  %615 = vmatprep.subr.bf16.mxu0 0
  %616 = vmatpush1.bf16.msra.mxu0 %v424
  %617 = vmatprep.subr.bf16.mxu0 0
  %618 = vmatpush2.bf16.msra.mxu0 0
  %619 = vmatprep.subr.bf16.mxu0 0
  %620 = vmatpush2.bf16.msra.mxu0 0
  %621 = vmatprep.subr.bf16.mxu0 0
  %622 = vmatpush2.bf16.msra.mxu0 0
  %623 = vmatprep.subr.bf16.mxu0 0
  %624 = vmatpush2.bf16.msra.mxu0 0
  %625 = vmatprep.subr.bf16.mxu0 0
  %626 = vmatpush2.bf16.msra.mxu0 0
  %627 = vmatprep.subr.bf16.mxu0 0
  %628 = vmatpush2.bf16.msra.mxu0 0
  %629 = vmatprep.subr.bf16.mxu0 0
  %630 = vmatpush2.bf16.msra.mxu0 0
  %631 = vmatprep.subr.bf16.mxu0 0
  %632 = vmatpush2.bf16.msra.mxu0 0
  %633 = vmatprep.mubr.bf16.mxu0 0
  %634 = vmatmul.mubr.bf16.gmra.mxu0 %v476
  %v635 = vpop.f32.mrf.mxu0
  %v636 = vadd.f32 %v595, %v635
  %v637 = vpop.f32.mrf.mxu0
  %v638 = vpop.f32.mrf.mxu0
  %v639 = vadd.f32 %v598, %v638
  %v640 = vpop.f32.mrf.mxu0
  %641 = vdwg.mxu0
  %v642 = vmax.f32 %v636, 0.0
  %v643 = vmax.f32 %v639, 0.0
  %v644 = vpack.c.bf16 %v643, %v642
  %v645 = vld [vmem:[%s3] sm:$0xf]
  %v646 = vld [vmem:[%s3 + $0x4] sm:$0xf]
  %v647 = vld [vmem:[%s3 + $0x8] sm:$0xf]
  %v648 = vld [vmem:[%s3 + $0xc] sm:$0xf]
  %v649 = vld [vmem:[%s3 + $0x10] sm:$0xf]
  %v650 = vld [vmem:[%s3 + $0x14] sm:$0xf]
  %v651 = vld [vmem:[%s3 + $0x18] sm:$0xf]
  %v652 = vld [vmem:[%s3 + $0x1c] sm:$0xf]
  %v653 = vld [vmem:[%s4] sm:$0x1]
  %v655 = vlaneseq
  %v656 = vshrl.u32 %v655, 7
  %v657 = vsub.s32 0, %v656
  %v658 = vrot.slane %v653, %v657
  %v668 = vunpack.c.l.b16 %v645
  %v669 = vunpack.c.l.b16 %v646
  %v670 = vunpack.c.l.b16 %v647
  %v671 = vunpack.c.l.b16 %v648
  %v672 = vunpack.c.l.b16 %v649
  %v673 = vunpack.c.l.b16 %v650
  %v674 = vunpack.c.l.b16 %v651
  %v675 = vunpack.c.l.b16 %v652
  %v676 = vpack.c.b16 %v669, %v668
  %v677 = vpack.c.b16 %v671, %v670
  %v678 = vpack.c.b16 %v673, %v672
  %v679 = vpack.c.b16 %v675, %v674
  %vm684 = vcmask 523264
  %v686 = vsel %vm684, %v644, 0
  %688 = vmatprep.subr.bf16.mxu0 0
  %689 = vmatpush1.bf16.msra.mxu0 0
  %690 = vmatprep.subr.bf16.mxu0 0
  %691 = vmatpush1.bf16.msra.mxu0 0
  %692 = vmatprep.subr.bf16.mxu0 0
  %693 = vmatpush1.bf16.msra.mxu0 0
  %694 = vmatprep.subr.bf16.mxu0 0
  %695 = vmatpush1.bf16.msra.mxu0 0
  %696 = vmatprep.subr.bf16.mxu0 0
  %697 = vmatpush1.bf16.msra.mxu0 %v679
  %698 = vmatprep.subr.bf16.mxu0 0
  %699 = vmatpush1.bf16.msra.mxu0 %v678
  %700 = vmatprep.subr.bf16.mxu0 0
  %701 = vmatpush1.bf16.msra.mxu0 %v677
  %702 = vmatprep.subr.bf16.mxu0 0
  %703 = vmatpush1.bf16.msra.mxu0 %v676
  %704 = vmatprep.subr.bf16.mxu0 0
  %705 = vmatpush2.bf16.msra.mxu0 0
  %706 = vmatprep.subr.bf16.mxu0 0
  %707 = vmatpush2.bf16.msra.mxu0 0
  %708 = vmatprep.subr.bf16.mxu0 0
  %709 = vmatpush2.bf16.msra.mxu0 0
  %710 = vmatprep.subr.bf16.mxu0 0
  %711 = vmatpush2.bf16.msra.mxu0 0
  %712 = vmatprep.subr.bf16.mxu0 0
  %713 = vmatpush2.bf16.msra.mxu0 0
  %714 = vmatprep.subr.bf16.mxu0 0
  %715 = vmatpush2.bf16.msra.mxu0 0
  %716 = vmatprep.subr.bf16.mxu0 0
  %717 = vmatpush2.bf16.msra.mxu0 0
  %718 = vmatprep.subr.bf16.mxu0 0
  %719 = vmatpush2.bf16.msra.mxu0 0
  %720 = vmatprep.mubr.bf16.mxu0 0
  %721 = vmatmul.mubr.bf16.gmra.mxu0 %v686
  %v722 = vpop.f32.mrf.mxu0
  %v723 = vadd.f32 %v658, %v722
  %v724 = vpop.f32.mrf.mxu0
  %v725 = vpop.f32.mrf.mxu0
  %v726 = vadd.f32 %v658, %v725
  %v727 = vpop.f32.mrf.mxu0
  %728 = vdwg.mxu0
  %v729 = vmax.f32 %v723, 0.0
  %v730 = vmax.f32 %v726, 0.0
  %v731 = vpack.c.bf16 %v730, %v729
  %v732 = vld [vmem:[%s5] sm:$0xf]
  %v733 = vld [vmem:[%s5 + $0x4] sm:$0xf]
  %v734 = vld [vmem:[%s5 + $0x8] sm:$0xf]
  %v735 = vld [vmem:[%s5 + $0xc] sm:$0xf]
  %v736 = vld [vmem:[%s6] sm:$0x1]
  %v738 = vlaneseq
  %v739 = vshrl.u32 %v738, 7
  %v740 = vsub.s32 0, %v739
  %v741 = vrot.slane %v736, %v740
  %v747 = vunpack.c.l.b16 %v732
  %v748 = vunpack.c.l.b16 %v733
  %v749 = vunpack.c.l.b16 %v734
  %v750 = vunpack.c.l.b16 %v735
  %v751 = vpack.c.b16 %v748, %v747
  %v752 = vpack.c.b16 %v750, %v749
  %vm755 = vcmask 261120
  %v757 = vsel %vm755, %v731, 0
  %759 = vmatprep.subr.bf16.mxu0 0
  %760 = vmatpush1.bf16.msra.mxu0 0
  %761 = vmatprep.subr.bf16.mxu0 0
  %762 = vmatpush1.bf16.msra.mxu0 0
  %763 = vmatprep.subr.bf16.mxu0 0
  %764 = vmatpush1.bf16.msra.mxu0 0
  %765 = vmatprep.subr.bf16.mxu0 0
  %766 = vmatpush1.bf16.msra.mxu0 0
  %767 = vmatprep.subr.bf16.mxu0 0
  %768 = vmatpush1.bf16.msra.mxu0 0
  %769 = vmatprep.subr.bf16.mxu0 0
  %770 = vmatpush1.bf16.msra.mxu0 0
  %771 = vmatprep.subr.bf16.mxu0 0
  %772 = vmatpush1.bf16.msra.mxu0 %v752
  %773 = vmatprep.subr.bf16.mxu0 0
  %774 = vmatpush1.bf16.msra.mxu0 %v751
  %775 = vmatprep.subr.bf16.mxu0 0
  %776 = vmatpush2.bf16.msra.mxu0 0
  %777 = vmatprep.subr.bf16.mxu0 0
  %778 = vmatpush2.bf16.msra.mxu0 0
  %779 = vmatprep.subr.bf16.mxu0 0
  %780 = vmatpush2.bf16.msra.mxu0 0
  %781 = vmatprep.subr.bf16.mxu0 0
  %782 = vmatpush2.bf16.msra.mxu0 0
  %783 = vmatprep.subr.bf16.mxu0 0
  %784 = vmatpush2.bf16.msra.mxu0 0
  %785 = vmatprep.subr.bf16.mxu0 0
  %786 = vmatpush2.bf16.msra.mxu0 0
  %787 = vmatprep.subr.bf16.mxu0 0
  %788 = vmatpush2.bf16.msra.mxu0 0
  %789 = vmatprep.subr.bf16.mxu0 0
  %790 = vmatpush2.bf16.msra.mxu0 0
  %791 = vmatprep.mubr.bf16.mxu0 0
  %792 = vmatmul.mubr.bf16.gmra.mxu0 %v757
  %v793 = vpop.f32.mrf.mxu0
  %v794 = vadd.f32 %v741, %v793
  %v795 = vpop.f32.mrf.mxu0
  %v796 = vpop.f32.mrf.mxu0
  %v797 = vadd.f32 %v741, %v796
  %v798 = vpop.f32.mrf.mxu0
  %799 = vdwg.mxu0
  %v800 = vld [vmem:[%s7] sm:$0xff]
  %v801 = vld [vmem:[%s7 + $0x8] sm:$0xff]
  %v802 = vld [vmem:[%s7 + $0x10] sm:$0xff]
  %v803 = vld [vmem:[%s7 + $0x18] sm:$0xff]
  %v804 = vld [vmem:[%s7 + $0x20] sm:$0xff]
  %v805 = vld [vmem:[%s7 + $0x28] sm:$0xff]
  %v806 = vld [vmem:[%s7 + $0x30] sm:$0xff]
  %v807 = vld [vmem:[%s7 + $0x38] sm:$0xff]
  %v808 = vld [vmem:[%s9] sm:$0x1]
  %v809 = vld [vmem:[%s8] sm:$0xff]
  %v810 = vld [vmem:[%s8 + $0x8] sm:$0x3]
  %vm811 = vcmask 80896
  %v813 = vsel %vm811, %v794, 0
  %v816 = vsel %vm811, %v797, 0
  %vm818 = vcmask 1041408
  %v820 = vsel %vm818, %v810, 0
  %822 = vmatprep.subr.mxu0 0.0
  %823 = vmatpush1.msra.mxu0 0.0
  %824 = vmatprep.subr.mxu0 0.0
  %825 = vmatpush1.msra.mxu0 0.0
  %826 = vmatprep.subr.mxu0 0.0
  %827 = vmatpush1.msra.mxu0 0.0
  %828 = vmatprep.subr.mxu0 0.0
  %829 = vmatpush1.msra.mxu0 0.0
  %830 = vmatprep.subr.mxu0 0.0
  %831 = vmatpush1.msra.mxu0 0.0
  %832 = vmatprep.subr.mxu0 0.0
  %833 = vmatpush1.msra.mxu0 0.0
  %834 = vmatprep.subr.mxu0 0.0
  %835 = vmatpush1.msra.mxu0 0.0
  %836 = vmatprep.subr.mxu0 0.0
  %837 = vmatpush1.msra.mxu0 0.0
  %838 = vmatprep.subr.mxu0 0.0
  %839 = vmatpush1.msra.mxu0 0.0
  %840 = vmatprep.subr.mxu0 0.0
  %841 = vmatpush1.msra.mxu0 0.0
  %842 = vmatprep.subr.mxu0 0.0
  %843 = vmatpush1.msra.mxu0 0.0
  %844 = vmatprep.subr.mxu0 0.0
  %845 = vmatpush1.msra.mxu0 0.0
  %846 = vmatprep.subr.mxu0 0.0
  %847 = vmatpush1.msra.mxu0 0.0
  %848 = vmatprep.subr.mxu0 0.0
  %849 = vmatpush1.msra.mxu0 0.0
  %850 = vmatprep.subr.mxu0 0.0
  %851 = vmatpush1.msra.mxu0 %v820
  %852 = vmatprep.subr.mxu0 0.0
  %853 = vmatpush1.msra.mxu0 %v809
  %854 = vmatprep.subr.mxu0 0.0
  %855 = vmatpush2.msra.mxu0 0.0
  %856 = vmatprep.subr.mxu0 0.0
  %857 = vmatpush2.msra.mxu0 0.0
  %858 = vmatprep.subr.mxu0 0.0
  %859 = vmatpush2.msra.mxu0 0.0
  %860 = vmatprep.subr.mxu0 0.0
  %861 = vmatpush2.msra.mxu0 0.0
  %862 = vmatprep.subr.mxu0 0.0
  %863 = vmatpush2.msra.mxu0 0.0
  %864 = vmatprep.subr.mxu0 0.0
  %865 = vmatpush2.msra.mxu0 0.0
  %866 = vmatprep.subr.mxu0 0.0
  %867 = vmatpush2.msra.mxu0 0.0
  %868 = vmatprep.subr.mxu0 0.0
  %869 = vmatpush2.msra.mxu0 0.0
  %870 = vmatprep.subr.mxu0 0.0
  %871 = vmatpush2.msra.mxu0 0.0
  %872 = vmatprep.subr.mxu0 0.0
  %873 = vmatpush2.msra.mxu0 0.0
  %874 = vmatprep.subr.mxu0 0.0
  %875 = vmatpush2.msra.mxu0 0.0
  %876 = vmatprep.subr.mxu0 0.0
  %877 = vmatpush2.msra.mxu0 0.0
  %878 = vmatprep.subr.mxu0 0.0
  %879 = vmatpush2.msra.mxu0 0.0
  %880 = vmatprep.subr.mxu0 0.0
  %881 = vmatpush2.msra.mxu0 0.0
  %882 = vmatprep.subr.mxu0 0.0
  %883 = vmatpush2.msra.mxu0 0.0
  %884 = vmatprep.subr.mxu0 0.0
  %885 = vmatpush2.msra.mxu0 0.0
  %886 = vmatprep.mubr.f32.mxu0 0.0
  %887 = vmatmul.mubr.f32.gmra.mxu0 %v813
  %v888 = vpop.f32.mrf.mxu0
  %v889 = vadd.f32 0.0, %v888
  %v890 = vpop.f32.mrf.mxu0
  %891 = vmatprep.mubr.f32.mxu0 0.0
  %892 = vmatmul.mubr.f32.gmra.mxu0 %v816
  %v893 = vpop.f32.mrf.mxu0
  %v894 = vadd.f32 0.0, %v893
  %v895 = vpop.f32.mrf.mxu0
  %896 = vdwg.mxu0
  %v897 = vmul.f32 %v889, 2.0
  %v898 = vmul.f32 %v894, 2.0
  %v900 = vlaneseq
  %v901 = vshrl.u32 %v900, 7
  %v902 = vsub.s32 0, %v901
  %v903 = vrot.slane %v808, %v902
  %v905 = vsub.f32 %v903, %v897
  %v906 = vsub.f32 %v903, %v898
  %v907 = vlaneseq
  %v908 = vand.u32 %v907, 127
  %v909 = vsel %vm684, %v905, inf
  %910 = vmin.xlane.f32.xlu0 %v909
  %v911 = vpop.xlane.xlu0 %910
  %v912 = vsel %vm684, %v906, inf
  %913 = vmin.xlane.f32.xlu0 %v912
  %v914 = vpop.xlane.xlu0 %913
  %vm915 = vcmp.eq.f32.partialorder %v905, %v911
  %vm916 = vcmp.eq.f32.partialorder %v906, %v914
  %v917 = vsel %vm915, %v908, 64
  %v918 = vsel %vm916, %v908, 64
  %v919 = vsel %vm684, %v917, 2147483647
  %v920 = vand.u32 %v919, 65535
  %v921 = vshra.s32 %v919, 16
  %v922 = vcvt.s32.f32 %v920
  %v923 = vcvt.s32.f32 %v921
  %924 = vmin.xlane.f32.xlu0 %v923
  %v925 = vpop.xlane.xlu0 %924
  %vm926 = vcmp.eq.f32.partialorder %v923, %v925
  %v927 = vsel %vm926, %v922, inf
  %928 = vmin.xlane.f32.xlu0 %v927
  %v929 = vpop.xlane.xlu0 %928
  %v930 = vcvt.f32.s32 %v929
  %v931 = vcvt.f32.s32 %v925
  %v932 = vshll.u32 %v931, 16
  %v933 = vadd.s32 %v932, %v930
  %v934 = vsel %vm684, %v918, 2147483647
  %v935 = vand.u32 %v934, 65535
  %v936 = vshra.s32 %v934, 16
  %v937 = vcvt.s32.f32 %v935
  %v938 = vcvt.s32.f32 %v936
  %939 = vmin.xlane.f32.xlu0 %v938
  %v940 = vpop.xlane.xlu0 %939
  %vm941 = vcmp.eq.f32.partialorder %v938, %v940
  %v942 = vsel %vm941, %v937, inf
  %943 = vmin.xlane.f32.xlu0 %v942
  %v944 = vpop.xlane.xlu0 %943
  %v945 = vcvt.f32.s32 %v944
  %v946 = vcvt.f32.s32 %v940
  %v947 = vshll.u32 %v946, 16
  %v948 = vadd.s32 %v947, %v945
  %vm949 = vcmp.eq.s32.totalorder %v908, %v933
  %vm950 = vcmp.eq.s32.totalorder %v908, %v948
  %v951 = vsel %vm949, 1, 0
  %v952 = vsel %vm950, 1, 0
  %v953 = vcvt.s32.f32 %v951
  %v954 = vcvt.s32.f32 %v952
  %v956 = vsel %vm684, %v953, 0
  %v959 = vsel %vm684, %v954, 0
  %961 = vmatprep.subr.mxu0 0.0
  %962 = vmatpush1.msra.mxu0 0.0
  %963 = vmatprep.subr.mxu0 0.0
  %964 = vmatpush1.msra.mxu0 0.0
  %965 = vmatprep.subr.mxu0 0.0
  %966 = vmatpush1.msra.mxu0 0.0
  %967 = vmatprep.subr.mxu0 0.0
  %968 = vmatpush1.msra.mxu0 0.0
  %969 = vmatprep.subr.mxu0 0.0
  %970 = vmatpush1.msra.mxu0 0.0
  %971 = vmatprep.subr.mxu0 0.0
  %972 = vmatpush1.msra.mxu0 0.0
  %973 = vmatprep.subr.mxu0 0.0
  %974 = vmatpush1.msra.mxu0 0.0
  %975 = vmatprep.subr.mxu0 0.0
  %976 = vmatpush1.msra.mxu0 0.0
  %977 = vmatprep.subr.mxu0 0.0
  %978 = vmatpush1.msra.mxu0 %v807
  %979 = vmatprep.subr.mxu0 0.0
  %980 = vmatpush1.msra.mxu0 %v806
  %981 = vmatprep.subr.mxu0 0.0
  %982 = vmatpush1.msra.mxu0 %v805
  %983 = vmatprep.subr.mxu0 0.0
  %984 = vmatpush1.msra.mxu0 %v804
  %985 = vmatprep.subr.mxu0 0.0
  %986 = vmatpush1.msra.mxu0 %v803
  %987 = vmatprep.subr.mxu0 0.0
  %988 = vmatpush1.msra.mxu0 %v802
  %989 = vmatprep.subr.mxu0 0.0
  %990 = vmatpush1.msra.mxu0 %v801
  %991 = vmatprep.subr.mxu0 0.0
  %992 = vmatpush1.msra.mxu0 %v800
  %993 = vmatprep.subr.mxu0 0.0
  %994 = vmatpush2.msra.mxu0 0.0
  %995 = vmatprep.subr.mxu0 0.0
  %996 = vmatpush2.msra.mxu0 0.0
  %997 = vmatprep.subr.mxu0 0.0
  %998 = vmatpush2.msra.mxu0 0.0
  %999 = vmatprep.subr.mxu0 0.0
  %1000 = vmatpush2.msra.mxu0 0.0
  %1001 = vmatprep.subr.mxu0 0.0
  %1002 = vmatpush2.msra.mxu0 0.0
  %1003 = vmatprep.subr.mxu0 0.0
  %1004 = vmatpush2.msra.mxu0 0.0
  %1005 = vmatprep.subr.mxu0 0.0
  %1006 = vmatpush2.msra.mxu0 0.0
  %1007 = vmatprep.subr.mxu0 0.0
  %1008 = vmatpush2.msra.mxu0 0.0
  %1009 = vmatprep.subr.mxu0 0.0
  %1010 = vmatpush2.msra.mxu0 0.0
  %1011 = vmatprep.subr.mxu0 0.0
  %1012 = vmatpush2.msra.mxu0 0.0
  %1013 = vmatprep.subr.mxu0 0.0
  %1014 = vmatpush2.msra.mxu0 0.0
  %1015 = vmatprep.subr.mxu0 0.0
  %1016 = vmatpush2.msra.mxu0 0.0
  %1017 = vmatprep.subr.mxu0 0.0
  %1018 = vmatpush2.msra.mxu0 0.0
  %1019 = vmatprep.subr.mxu0 0.0
  %1020 = vmatpush2.msra.mxu0 0.0
  %1021 = vmatprep.subr.mxu0 0.0
  %1022 = vmatpush2.msra.mxu0 0.0
  %1023 = vmatprep.subr.mxu0 0.0
  %1024 = vmatpush2.msra.mxu0 0.0
  %1025 = vmatprep.mubr.f32.mxu0 0.0
  %1026 = vmatmul.mubr.f32.gmra.mxu0 %v956
  %v1027 = vpop.f32.mrf.mxu0
  %v1028 = vadd.f32 0.0, %v1027
  %v1029 = vpop.f32.mrf.mxu0
  %1030 = vmatprep.mubr.f32.mxu0 0.0
  %1031 = vmatmul.mubr.f32.gmra.mxu0 %v959
  %v1032 = vpop.f32.mrf.mxu0
  %v1033 = vadd.f32 0.0, %v1032
  %v1034 = vpop.f32.mrf.mxu0
  %1035 = vdwg.mxu0
  %v1036 = vpack.c.bf16 %v1033, %v1028
  %v1037 = vld [vmem:[%s10] sm:$0xf]
  %v1038 = vld [vmem:[%s10 + $0x4] sm:$0x1]
  %v1039 = vld [vmem:[%s11] sm:$0x1]
  %v1041 = vlaneseq
  %v1042 = vshrl.u32 %v1041, 7
  %v1043 = vsub.s32 0, %v1042
  %v1044 = vrot.slane %v1039, %v1043
  %v1048 = vunpack.c.l.b16 %v1037
  %v1049 = vunpack.c.l.b16 %v1038
  %v1050 = vpack.c.b16 %v1049, %v1048
  %v1052 = vsel %vm811, %v1036, 0
  %vm1054 = vcmask 1044480
  %v1056 = vsel %vm1054, %v1050, 0
  %1058 = vmatprep.subr.bf16.mxu0 0
  %1059 = vmatpush1.bf16.msra.mxu0 0
  %1060 = vmatprep.subr.bf16.mxu0 0
  %1061 = vmatpush1.bf16.msra.mxu0 0
  %1062 = vmatprep.subr.bf16.mxu0 0
  %1063 = vmatpush1.bf16.msra.mxu0 0
  %1064 = vmatprep.subr.bf16.mxu0 0
  %1065 = vmatpush1.bf16.msra.mxu0 0
  %1066 = vmatprep.subr.bf16.mxu0 0
  %1067 = vmatpush1.bf16.msra.mxu0 0
  %1068 = vmatprep.subr.bf16.mxu0 0
  %1069 = vmatpush1.bf16.msra.mxu0 0
  %1070 = vmatprep.subr.bf16.mxu0 0
  %1071 = vmatpush1.bf16.msra.mxu0 0
  %1072 = vmatprep.subr.bf16.mxu0 0
  %1073 = vmatpush1.bf16.msra.mxu0 %v1056
  %1074 = vmatprep.subr.bf16.mxu0 0
  %1075 = vmatpush2.bf16.msra.mxu0 0
  %1076 = vmatprep.subr.bf16.mxu0 0
  %1077 = vmatpush2.bf16.msra.mxu0 0
  %1078 = vmatprep.subr.bf16.mxu0 0
  %1079 = vmatpush2.bf16.msra.mxu0 0
  %1080 = vmatprep.subr.bf16.mxu0 0
  %1081 = vmatpush2.bf16.msra.mxu0 0
  %1082 = vmatprep.subr.bf16.mxu0 0
  %1083 = vmatpush2.bf16.msra.mxu0 0
  %1084 = vmatprep.subr.bf16.mxu0 0
  %1085 = vmatpush2.bf16.msra.mxu0 0
  %1086 = vmatprep.subr.bf16.mxu0 0
  %1087 = vmatpush2.bf16.msra.mxu0 0
  %1088 = vmatprep.subr.bf16.mxu0 0
  %1089 = vmatpush2.bf16.msra.mxu0 0
  %1090 = vmatprep.mubr.bf16.mxu0 0
  %1091 = vmatmul.mubr.bf16.gmra.mxu0 %v1052
  %v1092 = vpop.f32.mrf.mxu0
  %v1093 = vadd.f32 %v1044, %v1092
  %v1094 = vpop.f32.mrf.mxu0
  %v1095 = vpop.f32.mrf.mxu0
  %v1096 = vadd.f32 %v1044, %v1095
  %v1097 = vpop.f32.mrf.mxu0
  %1098 = vdwg.mxu0
  %v1099 = vmax.f32 %v1093, 0.0
  %v1100 = vmax.f32 %v1096, 0.0
  %v1101 = vpack.c.bf16 %v1100, %v1099
  %v1102 = vld [vmem:[%s12] sm:$0xf]
  %v1103 = vld [vmem:[%s12 + $0x4] sm:$0xf]
  %v1104 = vld [vmem:[%s12 + $0x8] sm:$0xf]
  %v1105 = vld [vmem:[%s12 + $0xc] sm:$0xf]
  %v1106 = vld [vmem:[%s13] sm:$0x1]
  %v1108 = vlaneseq
  %v1109 = vshrl.u32 %v1108, 7
  %v1110 = vsub.s32 0, %v1109
  %v1111 = vrot.slane %v1106, %v1110
  %v1117 = vunpack.c.l.b16 %v1102
  %v1118 = vunpack.c.l.b16 %v1103
  %v1119 = vunpack.c.l.b16 %v1104
  %v1120 = vunpack.c.l.b16 %v1105
  %v1121 = vpack.c.b16 %v1118, %v1117
  %v1122 = vpack.c.b16 %v1120, %v1119
  %v1126 = vsel %vm755, %v1101, 0
  %1128 = vmatprep.subr.bf16.mxu0 0
  %1129 = vmatpush1.bf16.msra.mxu0 0
  %1130 = vmatprep.subr.bf16.mxu0 0
  %1131 = vmatpush1.bf16.msra.mxu0 0
  %1132 = vmatprep.subr.bf16.mxu0 0
  %1133 = vmatpush1.bf16.msra.mxu0 0
  %1134 = vmatprep.subr.bf16.mxu0 0
  %1135 = vmatpush1.bf16.msra.mxu0 0
  %1136 = vmatprep.subr.bf16.mxu0 0
  %1137 = vmatpush1.bf16.msra.mxu0 0
  %1138 = vmatprep.subr.bf16.mxu0 0
  %1139 = vmatpush1.bf16.msra.mxu0 0
  %1140 = vmatprep.subr.bf16.mxu0 0
  %1141 = vmatpush1.bf16.msra.mxu0 %v1122
  %1142 = vmatprep.subr.bf16.mxu0 0
  %1143 = vmatpush1.bf16.msra.mxu0 %v1121
  %1144 = vmatprep.subr.bf16.mxu0 0
  %1145 = vmatpush2.bf16.msra.mxu0 0
  %1146 = vmatprep.subr.bf16.mxu0 0
  %1147 = vmatpush2.bf16.msra.mxu0 0
  %1148 = vmatprep.subr.bf16.mxu0 0
  %1149 = vmatpush2.bf16.msra.mxu0 0
  %1150 = vmatprep.subr.bf16.mxu0 0
  %1151 = vmatpush2.bf16.msra.mxu0 0
  %1152 = vmatprep.subr.bf16.mxu0 0
  %1153 = vmatpush2.bf16.msra.mxu0 0
  %1154 = vmatprep.subr.bf16.mxu0 0
  %1155 = vmatpush2.bf16.msra.mxu0 0
  %1156 = vmatprep.subr.bf16.mxu0 0
  %1157 = vmatpush2.bf16.msra.mxu0 0
  %1158 = vmatprep.subr.bf16.mxu0 0
  %1159 = vmatpush2.bf16.msra.mxu0 0
  %1160 = vmatprep.mubr.bf16.mxu0 0
  %1161 = vmatmul.mubr.bf16.gmra.mxu0 %v1126
  %v1162 = vpop.f32.mrf.mxu0
  %v1163 = vadd.f32 %v1111, %v1162
  %v1164 = vpop.f32.mrf.mxu0
  %v1165 = vpop.f32.mrf.mxu0
  %v1166 = vadd.f32 %v1111, %v1165
  %v1167 = vpop.f32.mrf.mxu0
  %1168 = vdwg.mxu0
  %v1169 = vmax.f32 %v1163, 0.0
  %v1170 = vmax.f32 %v1166, 0.0
  %v1171 = vpack.c.bf16 %v1170, %v1169
  %v1172 = vld [vmem:[%s14] sm:$0xff]
  %v1173 = vld [vmem:[%s14 + $0x8] sm:$0xff]
  %v1174 = vld [vmem:[%s14 + $0x10] sm:$0xff]
  %v1175 = vld [vmem:[%s14 + $0x18] sm:$0xf]
  %v1176 = vld [vmem:[%s14 + $0x1c] sm:$0xff]
  %v1177 = vld [vmem:[%s14 + $0x24] sm:$0xff]
  %v1178 = vld [vmem:[%s14 + $0x2c] sm:$0xff]
  %v1179 = vld [vmem:[%s14 + $0x34] sm:$0xf]
  %v1180 = vld [vmem:[%s14 + $0x38] sm:$0xff]
  %v1181 = vld [vmem:[%s14 + $0x40] sm:$0xff]
  %v1182 = vld [vmem:[%s14 + $0x48] sm:$0xff]
  %v1183 = vld [vmem:[%s14 + $0x50] sm:$0xf]
  %v1184 = vld [vmem:[%s14 + $0x54] sm:$0xff]
  %v1185 = vld [vmem:[%s14 + $0x5c] sm:$0xff]
  %v1186 = vld [vmem:[%s14 + $0x64] sm:$0xff]
  %v1187 = vld [vmem:[%s14 + $0x6c] sm:$0xf]
  %v1188 = vld [vmem:[%s14 + $0x70] sm:$0xff]
  %v1189 = vld [vmem:[%s14 + $0x78] sm:$0xff]
  %v1190 = vld [vmem:[%s14 + $0x80] sm:$0xff]
  %v1191 = vld [vmem:[%s14 + $0x88] sm:$0xf]
  %v1192 = vld [vmem:[%s14 + $0x8c] sm:$0xff]
  %v1193 = vld [vmem:[%s14 + $0x94] sm:$0xff]
  %v1194 = vld [vmem:[%s14 + $0x9c] sm:$0xff]
  %v1195 = vld [vmem:[%s14 + $0xa4] sm:$0xf]
  %v1196 = vld [vmem:[%s14 + $0xa8] sm:$0xff]
  %v1197 = vld [vmem:[%s14 + $0xb0] sm:$0xff]
  %v1198 = vld [vmem:[%s14 + $0xb8] sm:$0xff]
  %v1199 = vld [vmem:[%s14 + $0xc0] sm:$0xf]
  %v1200 = vld [vmem:[%s14 + $0xc4] sm:$0xff]
  %v1201 = vld [vmem:[%s14 + $0xcc] sm:$0xff]
  %v1202 = vld [vmem:[%s14 + $0xd4] sm:$0xff]
  %v1203 = vld [vmem:[%s14 + $0xdc] sm:$0xf]
  %v1204 = vld [vmem:[%s15] sm:$0x7f]
  %v1206 = vlaneseq
  %v1207 = vshrl.u32 %v1206, 7
  %v1208 = vsub.s32 0, %v1207
  %v1209 = vrot.slane %v1204, %v1208
  %v1210 = vlaneseq
  %v1211 = vshrl.u32 %v1210, 7
  %v1212 = vsub.s32 1, %v1211
  %v1213 = vrot.slane %v1204, %v1212
  %v1214 = vlaneseq
  %v1215 = vshrl.u32 %v1214, 7
  %v1216 = vsub.s32 2, %v1215
  %v1217 = vrot.slane %v1204, %v1216
  %v1218 = vlaneseq
  %v1219 = vshrl.u32 %v1218, 7
  %v1220 = vsub.s32 3, %v1219
  %v1221 = vrot.slane %v1204, %v1220
  %v1222 = vlaneseq
  %v1223 = vshrl.u32 %v1222, 7
  %v1224 = vsub.s32 4, %v1223
  %v1225 = vrot.slane %v1204, %v1224
  %v1226 = vlaneseq
  %v1227 = vshrl.u32 %v1226, 7
  %v1228 = vsub.s32 5, %v1227
  %v1229 = vrot.slane %v1204, %v1228
  %v1230 = vlaneseq
  %v1231 = vshrl.u32 %v1230, 7
  %v1232 = vsub.s32 6, %v1231
  %v1233 = vrot.slane %v1204, %v1232
  %v1273 = vunpack.c.l.b16 %v1172
  %v1274 = vunpack.c.h.b16 %v1172
  %v1275 = vunpack.c.l.b16 %v1173
  %v1276 = vunpack.c.h.b16 %v1173
  %v1277 = vunpack.c.l.b16 %v1174
  %v1278 = vunpack.c.h.b16 %v1174
  %v1279 = vunpack.c.l.b16 %v1175
  %v1280 = vunpack.c.l.b16 %v1176
  %v1281 = vunpack.c.h.b16 %v1176
  %v1282 = vunpack.c.l.b16 %v1177
  %v1283 = vunpack.c.h.b16 %v1177
  %v1284 = vunpack.c.l.b16 %v1178
  %v1285 = vunpack.c.h.b16 %v1178
  %v1286 = vunpack.c.l.b16 %v1179
  %v1287 = vunpack.c.l.b16 %v1180
  %v1288 = vunpack.c.h.b16 %v1180
  %v1289 = vunpack.c.l.b16 %v1181
  %v1290 = vunpack.c.h.b16 %v1181
  %v1291 = vunpack.c.l.b16 %v1182
  %v1292 = vunpack.c.h.b16 %v1182
  %v1293 = vunpack.c.l.b16 %v1183
  %v1294 = vunpack.c.l.b16 %v1184
  %v1295 = vunpack.c.h.b16 %v1184
  %v1296 = vunpack.c.l.b16 %v1185
  %v1297 = vunpack.c.h.b16 %v1185
  %v1298 = vunpack.c.l.b16 %v1186
  %v1299 = vunpack.c.h.b16 %v1186
  %v1300 = vunpack.c.l.b16 %v1187
  %v1301 = vunpack.c.l.b16 %v1188
  %v1302 = vunpack.c.h.b16 %v1188
  %v1303 = vunpack.c.l.b16 %v1189
  %v1304 = vunpack.c.h.b16 %v1189
  %v1305 = vunpack.c.l.b16 %v1190
  %v1306 = vunpack.c.h.b16 %v1190
  %v1307 = vunpack.c.l.b16 %v1191
  %v1308 = vunpack.c.l.b16 %v1192
  %v1309 = vunpack.c.h.b16 %v1192
  %v1310 = vunpack.c.l.b16 %v1193
  %v1311 = vunpack.c.h.b16 %v1193
  %v1312 = vunpack.c.l.b16 %v1194
  %v1313 = vunpack.c.h.b16 %v1194
  %v1314 = vunpack.c.l.b16 %v1195
  %v1315 = vunpack.c.l.b16 %v1196
  %v1316 = vunpack.c.h.b16 %v1196
  %v1317 = vunpack.c.l.b16 %v1197
  %v1318 = vunpack.c.h.b16 %v1197
  %v1319 = vunpack.c.l.b16 %v1198
  %v1320 = vunpack.c.h.b16 %v1198
  %v1321 = vunpack.c.l.b16 %v1199
  %v1322 = vunpack.c.l.b16 %v1200
  %v1323 = vunpack.c.h.b16 %v1200
  %v1324 = vunpack.c.l.b16 %v1201
  %v1325 = vunpack.c.h.b16 %v1201
  %v1326 = vunpack.c.l.b16 %v1202
  %v1327 = vunpack.c.h.b16 %v1202
  %v1328 = vunpack.c.l.b16 %v1203
  %v1329 = vpack.c.b16 %v1280, %v1273
  %v1330 = vpack.c.b16 %v1281, %v1274
  %v1331 = vpack.c.b16 %v1282, %v1275
  %v1332 = vpack.c.b16 %v1283, %v1276
  %v1333 = vpack.c.b16 %v1284, %v1277
  %v1334 = vpack.c.b16 %v1285, %v1278
  %v1335 = vpack.c.b16 %v1286, %v1279
  %v1336 = vpack.c.b16 %v1294, %v1287
  %v1337 = vpack.c.b16 %v1295, %v1288
  %v1338 = vpack.c.b16 %v1296, %v1289
  %v1339 = vpack.c.b16 %v1297, %v1290
  %v1340 = vpack.c.b16 %v1298, %v1291
  %v1341 = vpack.c.b16 %v1299, %v1292
  %v1342 = vpack.c.b16 %v1300, %v1293
  %v1343 = vpack.c.b16 %v1308, %v1301
  %v1344 = vpack.c.b16 %v1309, %v1302
  %v1345 = vpack.c.b16 %v1310, %v1303
  %v1346 = vpack.c.b16 %v1311, %v1304
  %v1347 = vpack.c.b16 %v1312, %v1305
  %v1348 = vpack.c.b16 %v1313, %v1306
  %v1349 = vpack.c.b16 %v1314, %v1307
  %v1350 = vpack.c.b16 %v1322, %v1315
  %v1351 = vpack.c.b16 %v1323, %v1316
  %v1352 = vpack.c.b16 %v1324, %v1317
  %v1353 = vpack.c.b16 %v1325, %v1318
  %v1354 = vpack.c.b16 %v1326, %v1319
  %v1355 = vpack.c.b16 %v1327, %v1320
  %v1356 = vpack.c.b16 %v1328, %v1321
  %v1386 = vsel %vm684, %v1171, 0
  %1388 = vmatprep.subr.bf16.mxu0 0
  %1389 = vmatpush1.bf16.msra.mxu0 0
  %1390 = vmatprep.subr.bf16.mxu0 0
  %1391 = vmatpush1.bf16.msra.mxu0 0
  %1392 = vmatprep.subr.bf16.mxu0 0
  %1393 = vmatpush1.bf16.msra.mxu0 0
  %1394 = vmatprep.subr.bf16.mxu0 0
  %1395 = vmatpush1.bf16.msra.mxu0 0
  %1396 = vmatprep.subr.bf16.mxu0 %v1351
  %1397 = vmatpush1.bf16.msra.mxu0 %v1350
  %1398 = vmatprep.subr.bf16.mxu0 %v1344
  %1399 = vmatpush1.bf16.msra.mxu0 %v1343
  %1400 = vmatprep.subr.bf16.mxu0 %v1337
  %1401 = vmatpush1.bf16.msra.mxu0 %v1336
  %1402 = vmatprep.subr.bf16.mxu0 %v1330
  %1403 = vmatpush1.bf16.msra.mxu0 %v1329
  %1404 = vmatprep.subr.bf16.mxu0 0
  %1405 = vmatpush2.bf16.msra.mxu0 0
  %1406 = vmatprep.subr.bf16.mxu0 0
  %1407 = vmatpush2.bf16.msra.mxu0 0
  %1408 = vmatprep.subr.bf16.mxu0 0
  %1409 = vmatpush2.bf16.msra.mxu0 0
  %1410 = vmatprep.subr.bf16.mxu0 0
  %1411 = vmatpush2.bf16.msra.mxu0 0
  %1412 = vmatprep.subr.bf16.mxu0 0
  %1413 = vmatpush2.bf16.msra.mxu0 0
  %1414 = vmatprep.subr.bf16.mxu0 0
  %1415 = vmatpush2.bf16.msra.mxu0 0
  %1416 = vmatprep.subr.bf16.mxu0 0
  %1417 = vmatpush2.bf16.msra.mxu0 0
  %1418 = vmatprep.subr.bf16.mxu0 0
  %1419 = vmatpush2.bf16.msra.mxu0 0
  %1420 = vmatprep.mubr.bf16.mxu0 0
  %1421 = vmatmul.mubr.bf16.gmra.mxu0 %v1386
  %v1422 = vpop.f32.mrf.mxu0
  %v1423 = vadd.f32 %v1209, %v1422
  %v1424 = vpop.f32.mrf.mxu0
  %v1425 = vadd.f32 %v1213, %v1424
  %v1426 = vpop.f32.mrf.mxu0
  %v1427 = vadd.f32 %v1209, %v1426
  %v1428 = vpop.f32.mrf.mxu0
  %v1429 = vadd.f32 %v1213, %v1428
  %1430 = vdwg.mxu0
  %1431 = vmatprep.subr.bf16.mxu0 0
  %1432 = vmatpush1.bf16.msra.mxu0 0
  %1433 = vmatprep.subr.bf16.mxu0 0
  %1434 = vmatpush1.bf16.msra.mxu0 0
  %1435 = vmatprep.subr.bf16.mxu0 0
  %1436 = vmatpush1.bf16.msra.mxu0 0
  %1437 = vmatprep.subr.bf16.mxu0 0
  %1438 = vmatpush1.bf16.msra.mxu0 0
  %1439 = vmatprep.subr.bf16.mxu0 %v1353
  %1440 = vmatpush1.bf16.msra.mxu0 %v1352
  %1441 = vmatprep.subr.bf16.mxu0 %v1346
  %1442 = vmatpush1.bf16.msra.mxu0 %v1345
  %1443 = vmatprep.subr.bf16.mxu0 %v1339
  %1444 = vmatpush1.bf16.msra.mxu0 %v1338
  %1445 = vmatprep.subr.bf16.mxu0 %v1332
  %1446 = vmatpush1.bf16.msra.mxu0 %v1331
  %1447 = vmatprep.subr.bf16.mxu0 0
  %1448 = vmatpush2.bf16.msra.mxu0 0
  %1449 = vmatprep.subr.bf16.mxu0 0
  %1450 = vmatpush2.bf16.msra.mxu0 0
  %1451 = vmatprep.subr.bf16.mxu0 0
  %1452 = vmatpush2.bf16.msra.mxu0 0
  %1453 = vmatprep.subr.bf16.mxu0 0
  %1454 = vmatpush2.bf16.msra.mxu0 0
  %1455 = vmatprep.subr.bf16.mxu0 0
  %1456 = vmatpush2.bf16.msra.mxu0 0
  %1457 = vmatprep.subr.bf16.mxu0 0
  %1458 = vmatpush2.bf16.msra.mxu0 0
  %1459 = vmatprep.subr.bf16.mxu0 0
  %1460 = vmatpush2.bf16.msra.mxu0 0
  %1461 = vmatprep.subr.bf16.mxu0 0
  %1462 = vmatpush2.bf16.msra.mxu0 0
  %1463 = vmatprep.mubr.bf16.mxu0 0
  %1464 = vmatmul.mubr.bf16.gmra.mxu0 %v1386
  %v1465 = vpop.f32.mrf.mxu0
  %v1466 = vadd.f32 %v1217, %v1465
  %v1467 = vpop.f32.mrf.mxu0
  %v1468 = vadd.f32 %v1221, %v1467
  %v1469 = vpop.f32.mrf.mxu0
  %v1470 = vadd.f32 %v1217, %v1469
  %v1471 = vpop.f32.mrf.mxu0
  %v1472 = vadd.f32 %v1221, %v1471
  %1473 = vdwg.mxu0
  %1474 = vmatprep.subr.bf16.mxu0 0
  %1475 = vmatpush1.bf16.msra.mxu0 0
  %1476 = vmatprep.subr.bf16.mxu0 0
  %1477 = vmatpush1.bf16.msra.mxu0 0
  %1478 = vmatprep.subr.bf16.mxu0 0
  %1479 = vmatpush1.bf16.msra.mxu0 0
  %1480 = vmatprep.subr.bf16.mxu0 0
  %1481 = vmatpush1.bf16.msra.mxu0 0
  %1482 = vmatprep.subr.bf16.mxu0 %v1355
  %1483 = vmatpush1.bf16.msra.mxu0 %v1354
  %1484 = vmatprep.subr.bf16.mxu0 %v1348
  %1485 = vmatpush1.bf16.msra.mxu0 %v1347
  %1486 = vmatprep.subr.bf16.mxu0 %v1341
  %1487 = vmatpush1.bf16.msra.mxu0 %v1340
  %1488 = vmatprep.subr.bf16.mxu0 %v1334
  %1489 = vmatpush1.bf16.msra.mxu0 %v1333
  %1490 = vmatprep.subr.bf16.mxu0 0
  %1491 = vmatpush2.bf16.msra.mxu0 0
  %1492 = vmatprep.subr.bf16.mxu0 0
  %1493 = vmatpush2.bf16.msra.mxu0 0
  %1494 = vmatprep.subr.bf16.mxu0 0
  %1495 = vmatpush2.bf16.msra.mxu0 0
  %1496 = vmatprep.subr.bf16.mxu0 0
  %1497 = vmatpush2.bf16.msra.mxu0 0
  %1498 = vmatprep.subr.bf16.mxu0 0
  %1499 = vmatpush2.bf16.msra.mxu0 0
  %1500 = vmatprep.subr.bf16.mxu0 0
  %1501 = vmatpush2.bf16.msra.mxu0 0
  %1502 = vmatprep.subr.bf16.mxu0 0
  %1503 = vmatpush2.bf16.msra.mxu0 0
  %1504 = vmatprep.subr.bf16.mxu0 0
  %1505 = vmatpush2.bf16.msra.mxu0 0
  %1506 = vmatprep.mubr.bf16.mxu0 0
  %1507 = vmatmul.mubr.bf16.gmra.mxu0 %v1386
  %v1508 = vpop.f32.mrf.mxu0
  %v1509 = vadd.f32 %v1225, %v1508
  %v1510 = vpop.f32.mrf.mxu0
  %v1511 = vadd.f32 %v1229, %v1510
  %v1512 = vpop.f32.mrf.mxu0
  %v1513 = vadd.f32 %v1225, %v1512
  %v1514 = vpop.f32.mrf.mxu0
  %v1515 = vadd.f32 %v1229, %v1514
  %1516 = vdwg.mxu0
  %1517 = vmatprep.subr.bf16.mxu0 0
  %1518 = vmatpush1.bf16.msra.mxu0 0
  %1519 = vmatprep.subr.bf16.mxu0 0
  %1520 = vmatpush1.bf16.msra.mxu0 0
  %1521 = vmatprep.subr.bf16.mxu0 0
  %1522 = vmatpush1.bf16.msra.mxu0 0
  %1523 = vmatprep.subr.bf16.mxu0 0
  %1524 = vmatpush1.bf16.msra.mxu0 0
  %1525 = vmatprep.subr.bf16.mxu0 0
  %1526 = vmatpush1.bf16.msra.mxu0 %v1356
  %1527 = vmatprep.subr.bf16.mxu0 0
  %1528 = vmatpush1.bf16.msra.mxu0 %v1349
  %1529 = vmatprep.subr.bf16.mxu0 0
  %1530 = vmatpush1.bf16.msra.mxu0 %v1342
  %1531 = vmatprep.subr.bf16.mxu0 0
  %1532 = vmatpush1.bf16.msra.mxu0 %v1335
  %1533 = vmatprep.subr.bf16.mxu0 0
  %1534 = vmatpush2.bf16.msra.mxu0 0
  %1535 = vmatprep.subr.bf16.mxu0 0
  %1536 = vmatpush2.bf16.msra.mxu0 0
  %1537 = vmatprep.subr.bf16.mxu0 0
  %1538 = vmatpush2.bf16.msra.mxu0 0
  %1539 = vmatprep.subr.bf16.mxu0 0
  %1540 = vmatpush2.bf16.msra.mxu0 0
  %1541 = vmatprep.subr.bf16.mxu0 0
  %1542 = vmatpush2.bf16.msra.mxu0 0
  %1543 = vmatprep.subr.bf16.mxu0 0
  %1544 = vmatpush2.bf16.msra.mxu0 0
  %1545 = vmatprep.subr.bf16.mxu0 0
  %1546 = vmatpush2.bf16.msra.mxu0 0
  %1547 = vmatprep.subr.bf16.mxu0 0
  %1548 = vmatpush2.bf16.msra.mxu0 0
  %1549 = vmatprep.mubr.bf16.mxu0 0
  %1550 = vmatmul.mubr.bf16.gmra.mxu0 %v1386
  %v1551 = vpop.f32.mrf.mxu0
  %v1552 = vadd.f32 %v1233, %v1551
  %v1553 = vpop.f32.mrf.mxu0
  %v1554 = vpop.f32.mrf.mxu0
  %v1555 = vadd.f32 %v1233, %v1554
  %v1556 = vpop.f32.mrf.mxu0
  %1557 = vdwg.mxu0
  %v1558 = vsub.f32 0.0, %v1423
  %v1559 = vsub.f32 0.0, %v1425
  %v1560 = vsub.f32 0.0, %v1466
  %v1561 = vsub.f32 0.0, %v1468
  %v1562 = vsub.f32 0.0, %v1509
  %v1563 = vsub.f32 0.0, %v1511
  %v1564 = vsub.f32 0.0, %v1552
  %v1565 = vsub.f32 0.0, %v1427
  %v1566 = vsub.f32 0.0, %v1429
  %v1567 = vsub.f32 0.0, %v1470
  %v1568 = vsub.f32 0.0, %v1472
  %v1569 = vsub.f32 0.0, %v1513
  %v1570 = vsub.f32 0.0, %v1515
  %v1571 = vsub.f32 0.0, %v1555
  %v1572 = vmul.f32 %v1558, 1.442695
  %v1573 = vpow.pop %v1572
  %v1574 = vmul.f32 %v1559, 1.442695
  %v1575 = vpow.pop %v1574
  %v1576 = vmul.f32 %v1560, 1.442695
  %v1577 = vpow.pop %v1576
  %v1578 = vmul.f32 %v1561, 1.442695
  %v1579 = vpow.pop %v1578
  %v1580 = vmul.f32 %v1562, 1.442695
  %v1581 = vpow.pop %v1580
  %v1582 = vmul.f32 %v1563, 1.442695
  %v1583 = vpow.pop %v1582
  %v1584 = vmul.f32 %v1564, 1.442695
  %v1585 = vpow.pop %v1584
  %v1586 = vmul.f32 %v1565, 1.442695
  %v1587 = vpow.pop %v1586
  %v1588 = vmul.f32 %v1566, 1.442695
  %v1589 = vpow.pop %v1588
  %v1590 = vmul.f32 %v1567, 1.442695
  %v1591 = vpow.pop %v1590
  %v1592 = vmul.f32 %v1568, 1.442695
  %v1593 = vpow.pop %v1592
  %v1594 = vmul.f32 %v1569, 1.442695
  %v1595 = vpow.pop %v1594
  %v1596 = vmul.f32 %v1570, 1.442695
  %v1597 = vpow.pop %v1596
  %v1598 = vmul.f32 %v1571, 1.442695
  %v1599 = vpow.pop %v1598
  %v1600 = vadd.f32 %v1573, 1.0
  %v1601 = vadd.f32 %v1575, 1.0
  %v1602 = vadd.f32 %v1577, 1.0
  %v1603 = vadd.f32 %v1579, 1.0
  %v1604 = vadd.f32 %v1581, 1.0
  %v1605 = vadd.f32 %v1583, 1.0
  %v1606 = vadd.f32 %v1585, 1.0
  %v1607 = vadd.f32 %v1587, 1.0
  %v1608 = vadd.f32 %v1589, 1.0
  %v1609 = vadd.f32 %v1591, 1.0
  %v1610 = vadd.f32 %v1593, 1.0
  %v1611 = vadd.f32 %v1595, 1.0
  %v1612 = vadd.f32 %v1597, 1.0
  %v1613 = vadd.f32 %v1599, 1.0
  %v1614 = vrcp.pop %v1600
  %v1615 = vmul.f32 1.0, %v1614
  %v1616 = vrcp.pop %v1601
  %v1617 = vmul.f32 1.0, %v1616
  %v1618 = vrcp.pop %v1602
  %v1619 = vmul.f32 1.0, %v1618
  %v1620 = vrcp.pop %v1603
  %v1621 = vmul.f32 1.0, %v1620
  %v1622 = vrcp.pop %v1604
  %v1623 = vmul.f32 1.0, %v1622
  %v1624 = vrcp.pop %v1605
  %v1625 = vmul.f32 1.0, %v1624
  %v1626 = vrcp.pop %v1606
  %v1627 = vmul.f32 1.0, %v1626
  %v1628 = vrcp.pop %v1607
  %v1629 = vmul.f32 1.0, %v1628
  %v1630 = vrcp.pop %v1608
  %v1631 = vmul.f32 1.0, %v1630
  %v1632 = vrcp.pop %v1609
  %v1633 = vmul.f32 1.0, %v1632
  %v1634 = vrcp.pop %v1610
  %v1635 = vmul.f32 1.0, %v1634
  %v1636 = vrcp.pop %v1611
  %v1637 = vmul.f32 1.0, %v1636
  %v1638 = vrcp.pop %v1612
  %v1639 = vmul.f32 1.0, %v1638
  %v1640 = vrcp.pop %v1613
  %v1641 = vmul.f32 1.0, %v1640
  %v1642 = vpack.c.bf16 %v1629, %v1615
  %v1643 = vpack.c.bf16 %v1631, %v1617
  %v1644 = vpack.c.bf16 %v1633, %v1619
  %v1645 = vpack.c.bf16 %v1635, %v1621
  %v1646 = vpack.c.bf16 %v1637, %v1623
  %v1647 = vpack.c.bf16 %v1639, %v1625
  %v1648 = vpack.c.bf16 %v1641, %v1627
  %v1649 = vpack.c.bf16 %v797, %v794
  %1651 = vrot.lane.b32.xlu0 %v1649, 16
  %v1652 = vpop.permute.xlu0 %1651
  %1654 = vrot.lane.b32.xlu0 %v1036, 26
  %v1655 = vpop.permute.xlu0 %1654
  %v1658 = vsel %vm474, %v1648, %v1652
  %vm1659 = vcmask 211968
  %v1661 = vsel %vm1659, %v1658, %v1655
  %vm1662 = vcmask 293888
  %v1664 = vsel %vm1662, %v1661, 0
  %v1672 = vunpack.c.l.b16 %v1642
  %v1673 = vunpack.c.l.b16 %v1643
  %v1674 = vunpack.c.l.b16 %v1644
  %v1675 = vunpack.c.l.b16 %v1645
  %v1676 = vunpack.c.l.b16 %v1646
  %v1677 = vunpack.c.l.b16 %v1647
  %v1678 = vunpack.c.l.b16 %v1664
  %v1679 = vunpack.c.h.b16 %v1642
  %v1680 = vunpack.c.h.b16 %v1643
  %v1681 = vunpack.c.h.b16 %v1644
  %v1682 = vunpack.c.h.b16 %v1645
  %v1683 = vunpack.c.h.b16 %v1646
  %v1684 = vunpack.c.h.b16 %v1647
  %v1685 = vunpack.c.h.b16 %v1664
  %v1686 = vpack.c.b16 %v1673, %v1672
  %v1687 = vpack.c.b16 %v1675, %v1674
  %v1688 = vpack.c.b16 %v1677, %v1676
  %v1689 = vpack.c.b16 %v1678, %v1678
  %v1690 = vpack.c.b16 %v1680, %v1679
  %v1691 = vpack.c.b16 %v1682, %v1681
  %v1692 = vpack.c.b16 %v1684, %v1683
  %v1693 = vpack.c.b16 %v1685, %v1685
  %1702 = vst [vmem:[%s16] sm:$0xff] %v1686
  %1703 = vst [vmem:[%s16 + $0x8] sm:$0xff] %v1687
  %1704 = vst [vmem:[%s16 + $0x10] sm:$0xff] %v1688
  %1705 = vst [vmem:[%s16 + $0x18] sm:$0xf] %v1689
  %1706 = vst [vmem:[%s16 + $0x1c] sm:$0xff] %v1690
  %1707 = vst [vmem:[%s16 + $0x24] sm:$0xff] %v1691
  %1708 = vst [vmem:[%s16 + $0x2c] sm:$0xff] %v1692
  %1709 = vst [vmem:[%s16 + $0x34] sm:$0xf] %v1693
  // Predicated region
  $region66: #{vqvae_forward.1} parent=0 // pred_check
    _
  $region67: #{vqvae_forward.1} parent=0 // pred_check_branch
    %1711 = sbr.rel (0) target = $region69
  $region68: #{vqvae_forward.1} parent=0 // pred_region
    _
  $region69: #{vqvae_forward.1} parent=0 // pred_fallthru
    _
  // Predicated region
  $region70: #{vqvae_forward.1} parent=0 // pred_check
    _
  $region71: #{vqvae_forward.1} parent=0 // pred_check_branch
    %1713 = sbr.rel (0) target = $region73
  $region72: #{vqvae_forward.1} parent=0 // pred_region
    _
  $region73: #{vqvae_forward.1} parent=0 // pred_fallthru
    _

</llo_original>
